<compile_context>
chip_gen: v5e
topology: v5e:2x2
jax: 0.10.0
libtpu: 0.0.40
codegen_flags: <defaults>
</compile_context>

<pallas_src>
import jax
import jax.numpy as jnp
from jax import lax
from jax.experimental import pallas as pl
from jax.experimental.pallas import tpu as pltpu


def _replicator_traj_kernel(
    dts_ref,     # SMEM (T-1,) f32 : per-step dt
    x0_ref,      # VMEM (B, N) f32 : initial abundances
    c_ref,       # VMEM (B, E, N)  : fit_W^T @ (enc_b + emb) + fit_b  (precomputed)
    v_ref,       # VMEM (1, E, 1)  : fit_W^T @ enc_w                  (precomputed)
    dec_w_ref,   # VMEM (1, E, 1)  : linear decoder weights
    dec_b_ref,   # SMEM (1,)  f32  : linear decoder bias
    y_ref,       # VMEM (1, B, N)  : trajectory output block at time index t
    x_state,     # VMEM scratch (B, N) f32 : carried integration state
):
    t = pl.program_id(0)
    n_t = pl.num_programs(0)

    @pl.when(t == 0)
    def _init():
        x_state[...] = x0_ref[...]

    # y[t] is the state *before* this step's update, so y[0] == x0 and the full
    # trajectory is written from inside the kernel (no host-side concatenate).
    y_ref[0] = x_state[...].astype(y_ref.dtype)

    @pl.when(t + 1 < n_t)
    def _rk4_step():
        dt = dts_ref[t]
        dec_b = dec_b_ref[0]

        def ode_fn(z):
            # z: (B, N) f32 abundances.  Strategy axis N stays on lanes,
            # embedding axis E on sublanes.  The encoder + fitness matmul are
            # algebraically hoisted out of the kernel, so the eval is a single
            # fused broadcast-multiply-add + tanh + decode reduction.
            h = jnp.tanh(z[:, None, :] * v_ref[...] + c_ref[...])      # (B, E, N)
            fitness = jnp.sum(h * dec_w_ref[...], axis=1) + dec_b      # (B, N)
            # replicator ODE (gate = Identity, learnable_skip=False)
            xT_fx = jnp.sum(z * fitness, axis=-1, keepdims=True)       # (B, 1)
            return z * (fitness - xT_fx)

        x = x_state[...]
        k1 = ode_fn(x)
        k2 = ode_fn(x + (0.5 * dt) * k1)
        k3 = ode_fn(x + (0.5 * dt) * k2)
        k4 = ode_fn(x + dt * k3)
        x_state[...] = x + (dt / 6.0) * (k1 + 2.0 * (k2 + k3) + k4)


def replicator_forward(t, x, ids, params):
    """Equivalent of Replicator_CustomFitness_IdEmbed_XEncode.forward(t, x, ids).

    Args:
      t:      (T,) time points (T >= 2, monotone).
      x:      (B, N) initial abundances.
      ids:    (B, N) int32 OTU ids.
      params: dict with embed_table (D, E), enc_w/enc_b (E,), fit_W (E, E),
              fit_b (E,), dec_w (E,), dec_b scalar.
    Returns:
      y: (T, B, N) trajectory, y[0] == x.
    """
    B, N = x.shape
    T = t.shape[0]
    E = params["embed_table"].shape[1]
    if T < 2:
        raise ValueError("need at least two time points")

    # Id-embedding lookup happens once, outside the ODE loop (as in the
    # reference); enrich_fn=None.
    emb = jnp.take(params["embed_table"], ids, axis=0).astype(jnp.float32)  # (B,N,E)
    enc_w = params["enc_w"].astype(jnp.float32)
    enc_b = params["enc_b"].astype(jnp.float32)
    fit_W = params["fit_W"].astype(jnp.float32)
    fit_b = params["fit_b"].astype(jnp.float32)
    dec_w = params["dec_w"].astype(jnp.float32)
    dec_b = jnp.reshape(params["dec_b"], (1,)).astype(jnp.float32)

    # --- Algebraic hoist (T-independent, done once, outside the kernel) ---
    #   fit_W^T @ (x*enc_w + enc_b + emb) + fit_b  ==  v * x + C
    v = (fit_W.T @ enc_w).reshape(1, E, 1)                                  # (1,E,1)
    c = (jnp.einsum("bne,ef->bfn", enc_b + emb, fit_W)
         + fit_b[None, :, None]).astype(jnp.float32)                       # (B,E,N)
    dec_w3 = dec_w.reshape(1, E, 1)

    dts = (t[1:] - t[:-1]).astype(jnp.float32)                             # (T-1,)
    x32 = x.astype(jnp.float32)

    grid_spec = pltpu.PrefetchScalarGridSpec(
        num_scalar_prefetch=0,
        grid=(T,),
        in_specs=[
            pl.BlockSpec(memory_space=pltpu.MemorySpace.SMEM),      # dts
            pl.BlockSpec((B, N), lambda i: (0, 0)),                 # x0
            pl.BlockSpec((B, E, N), lambda i: (0, 0, 0)),           # C
            pl.BlockSpec((1, E, 1), lambda i: (0, 0, 0)),           # v
            pl.BlockSpec((1, E, 1), lambda i: (0, 0, 0)),           # dec_w
            pl.BlockSpec(memory_space=pltpu.MemorySpace.SMEM),      # dec_b
        ],
        out_specs=pl.BlockSpec((1, B, N), lambda i: (i, 0, 0)),
        scratch_shapes=[pltpu.VMEM((B, N), jnp.float32)],
    )

    return pl.pallas_call(
        _replicator_traj_kernel,
        out_shape=jax.ShapeDtypeStruct((T, B, N), x.dtype),
        grid_spec=grid_spec,
        compiler_params=pltpu.CompilerParams(
            dimension_semantics=("arbitrary",)),   # sequential carry over time
    )(dts, x32, c, v, dec_w3, dec_b)


def _reference_forward(t, x, ids, params):
    """Pure-JAX reference (non-hoisted math, natural (B, N, E) layout)."""
    emb = params["embed_table"][ids]                                  # (B, N, E)
    enc_w, enc_b = params["enc_w"], params["enc_b"]
    fit_W, fit_b = params["fit_W"], params["fit_b"]
    dec_w, dec_b = params["dec_w"], params["dec_b"]

    def ode(z):
        h = z[..., None] * enc_w + enc_b + emb                        # (B, N, E)
        h = jnp.tanh(jnp.einsum("bne,ef->bnf", h, fit_W) + fit_b)     # (B, N, E)
        fit = jnp.einsum("bne,e->bn", h, dec_w) + dec_b               # (B, N)
        xT_fx = jnp.sum(z * fit, axis=-1, keepdims=True)
        return z * (fit - xT_fx)

    def step(z, dt):
        k1 = ode(z)
        k2 = ode(z + 0.5 * dt * k1)
        k3 = ode(z + 0.5 * dt * k2)
        k4 = ode(z + dt * k3)
        zn = z + (dt / 6.0) * (k1 + 2.0 * k2 + 2.0 * k3 + k4)
        return zn, zn

    dts = t[1:] - t[:-1]
    _, ys = lax.scan(step, x, dts)
    return jnp.concatenate([x[None], ys], axis=0)


if __name__ == "__main__":
    key = jax.random.PRNGKey(0)
    ks = jax.random.split(key, 8)

    B, N, E, NUM_IDS, T = 8, 128, 64, 256, 5

    # Initial state on the probability simplex (standard for replicator dynamics).
    x0 = jax.nn.softmax(jax.random.normal(ks[0], (B, N), dtype=jnp.float32), axis=-1)
    ids = jax.random.randint(ks[1], (B, N), 0, NUM_IDS, dtype=jnp.int32)
    t = jnp.linspace(0.0, 1.0, T, dtype=jnp.float32)

    params = {
        "embed_table": 0.1 * jax.random.normal(ks[2], (NUM_IDS, E), dtype=jnp.float32),
        "enc_w": jax.random.normal(ks[3], (E,), dtype=jnp.float32),
        "enc_b": 0.1 * jax.random.normal(ks[4], (E,), dtype=jnp.float32),
        "fit_W": (1.0 / jnp.sqrt(E)) * jax.random.normal(ks[5], (E, E), dtype=jnp.float32),
        "fit_b": 0.1 * jax.random.normal(ks[6], (E,), dtype=jnp.float32),
        "dec_w": (1.0 / jnp.sqrt(E)) * jax.random.normal(ks[7], (E,), dtype=jnp.float32),
        "dec_b": jnp.float32(0.05),
    }

    y = jax.jit(replicator_forward)(t, x0, ids, params)
    y = jax.block_until_ready(y)

    assert y.shape == (T, B, N), y.shape
    assert bool(jnp.all(jnp.isfinite(y)))

    y_ref = _reference_forward(t, x0, ids, params)
    max_err = float(jnp.max(jnp.abs(y - y_ref)))
    assert max_err < 1e-3, f"max abs error vs pure-JAX reference: {max_err}"

    print("KERNEL_OK")
</pallas_src>

<mosaic_0001>
module attributes {stable_mosaic.version = 11 : i64} {
  func.func @_replicator_traj_kernel(%arg0: i32, %arg1: memref<4xf32, #tpu.memory_space<smem>>, %arg2: memref<8x128xf32, #tpu.memory_space<vmem>>, %arg3: memref<8x64x128xf32, #tpu.memory_space<vmem>>, %arg4: memref<1x64x1xf32, #tpu.memory_space<vmem>>, %arg5: memref<1x64x1xf32, #tpu.memory_space<vmem>>, %arg6: memref<1xf32, #tpu.memory_space<smem>>, %arg7: memref<1x8x128xf32, #tpu.memory_space<vmem>>, %arg8: memref<8x128xf32, #tpu.memory_space<vmem>>) attributes {dimension_semantics = [#tpu.dimension_semantics<arbitrary>], iteration_bounds = array<i64: 5>, scalar_prefetch = 0 : i64, scratch_operands = 1 : i64, tpu.core_type = #tpu.core_type<tc>, window_params = [{transform_indices = @transform_0, window_bounds = array<i64: 4>}, {pipeline_mode = #tpu.pipeline_mode<synchronous>, transform_indices = @transform_1, window_bounds = array<i64: 8, 128>}, {pipeline_mode = #tpu.pipeline_mode<synchronous>, transform_indices = @transform_2, window_bounds = array<i64: 8, 64, 128>}, {pipeline_mode = #tpu.pipeline_mode<synchronous>, transform_indices = @transform_3, window_bounds = array<i64: 1, 64, 1>}, {pipeline_mode = #tpu.pipeline_mode<synchronous>, transform_indices = @transform_4, window_bounds = array<i64: 1, 64, 1>}, {transform_indices = @transform_5, window_bounds = array<i64: 1>}, {transform_indices = @transform_6, window_bounds = array<i64: 1, 8, 128>}]} {
    %c0_i32 = arith.constant 0 : i32
    %0 = arith.cmpi eq, %arg0, %c0_i32 : i32
    %1 = arith.extui %0 : i1 to i32
    %c0_i32_0 = arith.constant 0 : i32
    %2 = arith.cmpi ne, %1, %c0_i32_0 : i32
    scf.if %2 {
      %c0_6 = arith.constant 0 : index
      %c0_7 = arith.constant 0 : index
      %11 = vector.load %arg2[%c0_6, %c0_7] : memref<8x128xf32, #tpu.memory_space<vmem>>, vector<8x128xf32>
      %c0_8 = arith.constant 0 : index
      %c0_9 = arith.constant 0 : index
      %12 = vector.load %arg8[%c0_8, %c0_9] : memref<8x128xf32, #tpu.memory_space<vmem>>, vector<8x128xf32>
      tpu.vector_store %arg8[%c0_8, %c0_9], %11 {strides = array<i32>} : memref<8x128xf32, #tpu.memory_space<vmem>>, vector<8x128xf32>,
    } else {
    }
    %c0 = arith.constant 0 : index
    %c0_1 = arith.constant 0 : index
    %3 = vector.load %arg8[%c0, %c0_1] : memref<8x128xf32, #tpu.memory_space<vmem>>, vector<8x128xf32>
    %c0_2 = arith.constant 0 : index
    %c0_3 = arith.constant 0 : index
    %c0_4 = arith.constant 0 : index
    %4 = vector.load %arg7[%c0_2, %c0_3, %c0_4] : memref<1x8x128xf32, #tpu.memory_space<vmem>>, vector<1x8x128xf32>
    %5 = vector.shape_cast %4 : vector<1x8x128xf32> to vector<8x128xf32>
    %6 = vector.shape_cast %3 : vector<8x128xf32> to vector<1x8x128xf32>
    tpu.vector_store %arg7[%c0_2, %c0_3, %c0_4], %6 {strides = array<i32>} : memref<1x8x128xf32, #tpu.memory_space<vmem>>, vector<1x8x128xf32>,
    %c1_i32 = arith.constant 1 : i32
    %7 = arith.addi %arg0, %c1_i32 : i32
    %c5_i32 = arith.constant 5 : i32
    %8 = arith.cmpi slt, %7, %c5_i32 : i32
    %9 = arith.extui %8 : i1 to i32
    %c0_i32_5 = arith.constant 0 : i32
    %10 = arith.cmpi ne, %9, %c0_i32_5 : i32
    scf.if %10 {
      %11 = arith.index_cast %arg0 : i32 to index
      %12 = memref.load %arg1[%11] : memref<4xf32, #tpu.memory_space<smem>>
      %c0_6 = arith.constant 0 : index
      %13 = memref.load %arg6[%c0_6] : memref<1xf32, #tpu.memory_space<smem>>
      %c0_7 = arith.constant 0 : index
      %c0_8 = arith.constant 0 : index
      %14 = vector.load %arg8[%c0_7, %c0_8] : memref<8x128xf32, #tpu.memory_space<vmem>>, vector<8x128xf32>
      %15 = vector.shape_cast %14 : vector<8x128xf32> to vector<8x1x128xf32>
      %c0_9 = arith.constant 0 : index
      %c0_10 = arith.constant 0 : index
      %c0_11 = arith.constant 0 : index
      %16 = vector.load %arg4[%c0_9, %c0_10, %c0_11] : memref<1x64x1xf32, #tpu.memory_space<vmem>>, vector<1x64x1xf32>
      %17 = vector.broadcast %15 : vector<8x1x128xf32> to vector<8x64x128xf32>
      %18 = vector.broadcast %16 : vector<1x64x1xf32> to vector<8x64x128xf32>
      %19 = arith.mulf %17, %18 : vector<8x64x128xf32>
      %c0_12 = arith.constant 0 : index
      %c0_13 = arith.constant 0 : index
      %c0_14 = arith.constant 0 : index
      %20 = vector.load %arg3[%c0_12, %c0_13, %c0_14] : memref<8x64x128xf32, #tpu.memory_space<vmem>>, vector<8x64x128xf32>
      %21 = arith.addf %19, %20 : vector<8x64x128xf32>
      %22 = math.tanh %21 : vector<8x64x128xf32>
      %c0_15 = arith.constant 0 : index
      %c0_16 = arith.constant 0 : index
      %c0_17 = arith.constant 0 : index
      %23 = vector.load %arg5[%c0_15, %c0_16, %c0_17] : memref<1x64x1xf32, #tpu.memory_space<vmem>>, vector<1x64x1xf32>
      %24 = vector.broadcast %23 : vector<1x64x1xf32> to vector<8x64x128xf32>
      %25 = arith.mulf %22, %24 : vector<8x64x128xf32>
      %cst = arith.constant dense<0.000000e+00> : vector<8x128xf32>
      %26 = vector.multi_reduction <add>, %25, %cst [1] : vector<8x64x128xf32> to vector<8x128xf32>
      %27 = vector.broadcast %13 : f32 to vector<8x128xf32>
      %28 = arith.addf %26, %27 : vector<8x128xf32>
      %29 = arith.mulf %14, %28 : vector<8x128xf32>
      %cst_18 = arith.constant dense<0.000000e+00> : vector<8xf32>
      %30 = vector.multi_reduction <add>, %29, %cst_18 [1] : vector<8x128xf32> to vector<8xf32>
      %31 = vector.shape_cast %30 : vector<8xf32> to vector<8x1xf32>
      %32 = vector.broadcast %31 : vector<8x1xf32> to vector<8x128xf32>
      %33 = arith.subf %28, %32 : vector<8x128xf32>
      %34 = arith.mulf %14, %33 : vector<8x128xf32>
      %cst_19 = arith.constant 5.000000e-01 : f32
      %35 = arith.mulf %cst_19, %12 : f32
      %36 = vector.broadcast %35 : f32 to vector<8x128xf32>
      %37 = arith.mulf %36, %34 : vector<8x128xf32>
      %38 = arith.addf %14, %37 : vector<8x128xf32>
      %39 = vector.shape_cast %38 : vector<8x128xf32> to vector<8x1x128xf32>
      %c0_20 = arith.constant 0 : index
      %c0_21 = arith.constant 0 : index
      %c0_22 = arith.constant 0 : index
      %40 = vector.load %arg4[%c0_20, %c0_21, %c0_22] : memref<1x64x1xf32, #tpu.memory_space<vmem>>, vector<1x64x1xf32>
      %41 = vector.broadcast %39 : vector<8x1x128xf32> to vector<8x64x128xf32>
      %42 = vector.broadcast %40 : vector<1x64x1xf32> to vector<8x64x128xf32>
      %43 = arith.mulf %41, %42 : vector<8x64x128xf32>
      %c0_23 = arith.constant 0 : index
      %c0_24 = arith.constant 0 : index
      %c0_25 = arith.constant 0 : index
      %44 = vector.load %arg3[%c0_23, %c0_24, %c0_25] : memref<8x64x128xf32, #tpu.memory_space<vmem>>, vector<8x64x128xf32>
      %45 = arith.addf %43, %44 : vector<8x64x128xf32>
      %46 = math.tanh %45 : vector<8x64x128xf32>
      %c0_26 = arith.constant 0 : index
      %c0_27 = arith.constant 0 : index
      %c0_28 = arith.constant 0 : index
      %47 = vector.load %arg5[%c0_26, %c0_27, %c0_28] : memref<1x64x1xf32, #tpu.memory_space<vmem>>, vector<1x64x1xf32>
      %48 = vector.broadcast %47 : vector<1x64x1xf32> to vector<8x64x128xf32>
      %49 = arith.mulf %46, %48 : vector<8x64x128xf32>
      %cst_29 = arith.constant dense<0.000000e+00> : vector<8x128xf32>
      %50 = vector.multi_reduction <add>, %49, %cst_29 [1] : vector<8x64x128xf32> to vector<8x128xf32>
      %51 = vector.broadcast %13 : f32 to vector<8x128xf32>
      %52 = arith.addf %50, %51 : vector<8x128xf32>
      %53 = arith.mulf %38, %52 : vector<8x128xf32>
      %cst_30 = arith.constant dense<0.000000e+00> : vector<8xf32>
      %54 = vector.multi_reduction <add>, %53, %cst_30 [1] : vector<8x128xf32> to vector<8xf32>
      %55 = vector.shape_cast %54 : vector<8xf32> to vector<8x1xf32>
      %56 = vector.broadcast %55 : vector<8x1xf32> to vector<8x128xf32>
      %57 = arith.subf %52, %56 : vector<8x128xf32>
      %58 = arith.mulf %38, %57 : vector<8x128xf32>
      %cst_31 = arith.constant 5.000000e-01 : f32
      %59 = arith.mulf %cst_31, %12 : f32
      %60 = vector.broadcast %59 : f32 to vector<8x128xf32>
      %61 = arith.mulf %60, %58 : vector<8x128xf32>
      %62 = arith.addf %14, %61 : vector<8x128xf32>
      %63 = vector.shape_cast %62 : vector<8x128xf32> to vector<8x1x128xf32>
      %c0_32 = arith.constant 0 : index
      %c0_33 = arith.constant 0 : index
      %c0_34 = arith.constant 0 : index
      %64 = vector.load %arg4[%c0_32, %c0_33, %c0_34] : memref<1x64x1xf32, #tpu.memory_space<vmem>>, vector<1x64x1xf32>
      %65 = vector.broadcast %63 : vector<8x1x128xf32> to vector<8x64x128xf32>
      %66 = vector.broadcast %64 : vector<1x64x1xf32> to vector<8x64x128xf32>
      %67 = arith.mulf %65, %66 : vector<8x64x128xf32>
      %c0_35 = arith.constant 0 : index
      %c0_36 = arith.constant 0 : index
      %c0_37 = arith.constant 0 : index
      %68 = vector.load %arg3[%c0_35, %c0_36, %c0_37] : memref<8x64x128xf32, #tpu.memory_space<vmem>>, vector<8x64x128xf32>
      %69 = arith.addf %67, %68 : vector<8x64x128xf32>
      %70 = math.tanh %69 : vector<8x64x128xf32>
      %c0_38 = arith.constant 0 : index
      %c0_39 = arith.constant 0 : index
      %c0_40 = arith.constant 0 : index
      %71 = vector.load %arg5[%c0_38, %c0_39, %c0_40] : memref<1x64x1xf32, #tpu.memory_space<vmem>>, vector<1x64x1xf32>
      %72 = vector.broadcast %71 : vector<1x64x1xf32> to vector<8x64x128xf32>
      %73 = arith.mulf %70, %72 : vector<8x64x128xf32>
      %cst_41 = arith.constant dense<0.000000e+00> : vector<8x128xf32>
      %74 = vector.multi_reduction <add>, %73, %cst_41 [1] : vector<8x64x128xf32> to vector<8x128xf32>
      %75 = vector.broadcast %13 : f32 to vector<8x128xf32>
      %76 = arith.addf %74, %75 : vector<8x128xf32>
      %77 = arith.mulf %62, %76 : vector<8x128xf32>
      %cst_42 = arith.constant dense<0.000000e+00> : vector<8xf32>
      %78 = vector.multi_reduction <add>, %77, %cst_42 [1] : vector<8x128xf32> to vector<8xf32>
      %79 = vector.shape_cast %78 : vector<8xf32> to vector<8x1xf32>
      %80 = vector.broadcast %79 : vector<8x1xf32> to vector<8x128xf32>
      %81 = arith.subf %76, %80 : vector<8x128xf32>
      %82 = arith.mulf %62, %81 : vector<8x128xf32>
      %83 = vector.broadcast %12 : f32 to vector<8x128xf32>
      %84 = arith.mulf %83, %82 : vector<8x128xf32>
      %85 = arith.addf %14, %84 : vector<8x128xf32>
      %86 = vector.shape_cast %85 : vector<8x128xf32> to vector<8x1x128xf32>
      %c0_43 = arith.constant 0 : index
      %c0_44 = arith.constant 0 : index
      %c0_45 = arith.constant 0 : index
      %87 = vector.load %arg4[%c0_43, %c0_44, %c0_45] : memref<1x64x1xf32, #tpu.memory_space<vmem>>, vector<1x64x1xf32>
      %88 = vector.broadcast %86 : vector<8x1x128xf32> to vector<8x64x128xf32>
      %89 = vector.broadcast %87 : vector<1x64x1xf32> to vector<8x64x128xf32>
      %90 = arith.mulf %88, %89 : vector<8x64x128xf32>
      %c0_46 = arith.constant 0 : index
      %c0_47 = arith.constant 0 : index
      %c0_48 = arith.constant 0 : index
      %91 = vector.load %arg3[%c0_46, %c0_47, %c0_48] : memref<8x64x128xf32, #tpu.memory_space<vmem>>, vector<8x64x128xf32>
      %92 = arith.addf %90, %91 : vector<8x64x128xf32>
      %93 = math.tanh %92 : vector<8x64x128xf32>
      %c0_49 = arith.constant 0 : index
      %c0_50 = arith.constant 0 : index
      %c0_51 = arith.constant 0 : index
      %94 = vector.load %arg5[%c0_49, %c0_50, %c0_51] : memref<1x64x1xf32, #tpu.memory_space<vmem>>, vector<1x64x1xf32>
      %95 = vector.broadcast %94 : vector<1x64x1xf32> to vector<8x64x128xf32>
      %96 = arith.mulf %93, %95 : vector<8x64x128xf32>
      %cst_52 = arith.constant dense<0.000000e+00> : vector<8x128xf32>
      %97 = vector.multi_reduction <add>, %96, %cst_52 [1] : vector<8x64x128xf32> to vector<8x128xf32>
      %98 = vector.broadcast %13 : f32 to vector<8x128xf32>
      %99 = arith.addf %97, %98 : vector<8x128xf32>
      %100 = arith.mulf %85, %99 : vector<8x128xf32>
      %cst_53 = arith.constant dense<0.000000e+00> : vector<8xf32>
      %101 = vector.multi_reduction <add>, %100, %cst_53 [1] : vector<8x128xf32> to vector<8xf32>
      %102 = vector.shape_cast %101 : vector<8xf32> to vector<8x1xf32>
      %103 = vector.broadcast %102 : vector<8x1xf32> to vector<8x128xf32>
      %104 = arith.subf %99, %103 : vector<8x128xf32>
      %105 = arith.mulf %85, %104 : vector<8x128xf32>
      %cst_54 = arith.constant 6.000000e+00 : f32
      %106 = arith.divf %12, %cst_54 : f32
      %107 = arith.addf %58, %82 : vector<8x128xf32>
      %cst_55 = arith.constant 2.000000e+00 : f32
      %108 = vector.broadcast %cst_55 : f32 to vector<8x128xf32>
      %109 = arith.mulf %108, %107 : vector<8x128xf32>
      %110 = arith.addf %34, %109 : vector<8x128xf32>
      %111 = arith.addf %110, %105 : vector<8x128xf32>
      %112 = vector.broadcast %106 : f32 to vector<8x128xf32>
      %113 = arith.mulf %112, %111 : vector<8x128xf32>
      %114 = arith.addf %14, %113 : vector<8x128xf32>
      %c0_56 = arith.constant 0 : index
      %c0_57 = arith.constant 0 : index
      %115 = vector.load %arg8[%c0_56, %c0_57] : memref<8x128xf32, #tpu.memory_space<vmem>>, vector<8x128xf32>
      tpu.vector_store %arg8[%c0_56, %c0_57], %114 {strides = array<i32>} : memref<8x128xf32, #tpu.memory_space<vmem>>, vector<8x128xf32>,
    } else {
    }
    return
  }
  func.func @transform_0(%arg0: i32) -> i32 {
    %c0_i32 = arith.constant 0 : i32
    %c0_i32_0 = arith.constant 0 : i32
    return %c0_i32 : i32
  }
  func.func @transform_1(%arg0: i32) -> (i32, i32) {
    %c0_i32 = arith.constant 0 : i32
    %c0_i32_0 = arith.constant 0 : i32
    %c0_i32_1 = arith.constant 0 : i32
    return %c0_i32, %c0_i32_0 : i32, i32
  }
  func.func @transform_2(%arg0: i32) -> (i32, i32, i32) {
    %c0_i32 = arith.constant 0 : i32
    %c0_i32_0 = arith.constant 0 : i32
    %c0_i32_1 = arith.constant 0 : i32
    %c0_i32_2 = arith.constant 0 : i32
    return %c0_i32, %c0_i32_0, %c0_i32_1 : i32, i32, i32
  }
  func.func @transform_3(%arg0: i32) -> (i32, i32, i32) {
    %c0_i32 = arith.constant 0 : i32
    %c0_i32_0 = arith.constant 0 : i32
    %c0_i32_1 = arith.constant 0 : i32
    %c0_i32_2 = arith.constant 0 : i32
    return %c0_i32, %c0_i32_0, %c0_i32_1 : i32, i32, i32
  }
  func.func @transform_4(%arg0: i32) -> (i32, i32, i32) {
    %c0_i32 = arith.constant 0 : i32
    %c0_i32_0 = arith.constant 0 : i32
    %c0_i32_1 = arith.constant 0 : i32
    %c0_i32_2 = arith.constant 0 : i32
    return %c0_i32, %c0_i32_0, %c0_i32_1 : i32, i32, i32
  }
  func.func @transform_5(%arg0: i32) -> i32 {
    %c0_i32 = arith.constant 0 : i32
    %c0_i32_0 = arith.constant 0 : i32
    return %c0_i32 : i32
  }
  func.func @transform_6(%arg0: i32) -> (i32, i32, i32) {
    %c0_i32 = arith.constant 0 : i32
    %c0_i32_0 = arith.constant 0 : i32
    %c0_i32_1 = arith.constant 0 : i32
    return %arg0, %c0_i32, %c0_i32_0 : i32, i32, i32
  }
}

</mosaic_0001>

<llo_original>
// kernel: replicator_forward.1
$region0: #{replicator_forward.1}
  #allocation0 [shape = 'u32[]', space=smem, size = 0x4, offset = 0x4, fixed_abs, tag = 'smem constant byte address 0x4 - core index']
  #allocation1 [shape = 'u32[72,128]{1,0:T(1,128)}', space=vmem, size = 0x9000, scoped, tag = 'internal scratch']
  #allocation2 [shape = 'f32[8,128]{1,0:T(8,128)}', space=vmem, size = 0x1000, scoped, tag = 'scratch operand']
  #allocation3 [shape = 'f32[1]{0:T(128)S(6)}', space=smem, size = 0x200, scoped, tag = 'scoped memory for replicator_forward.1']
  %s0 = inlined_call_operand.vmem [shape: f32[4], index: 0, kind: input, shape index: {}]
  %s1 = inlined_call_operand.vmem [shape: f32[8,128], index: 1, kind: input, shape index: {}]
  %s2 = inlined_call_operand.vmem [shape: f32[8,64,128], index: 2, kind: input, shape index: {}]
  %s3 = inlined_call_operand.vmem [shape: f32[1,64,1], index: 3, kind: input, shape index: {}]
  %s4 = inlined_call_operand.vmem [shape: f32[1,64,1], index: 4, kind: input, shape index: {}]
  %s5 = inlined_call_operand.<no memory space> [shape: f32[1], index: 5, kind: input, shape index: {}]
  %s6 = inlined_call_operand.hbm [shape: f32[5,8,128], index: 6, kind: output, shape index: {}]
  %s7 = sld [smem:[#allocation0]]
  $region69: #{replicator_forward.1} parent=0
    _
  %s9 = ssub.s32 1, %s7
  %s10 = scalar_select 0, %s9, %s7
  %11 = sst [smem:[#allocation3]] %s5
  $region1: #{replicator_forward.1} parent=0
    #allocation4 [shape = 'u8[512]{0}', space=smem, size = 0x200, scoped, tag = 'input window, operand 0, single buffered']
    #allocation5 [shape = 's32[2]{0}', space=sflag, size = 0x8, scoped, tag = 'scoped memory for replicator_forward.1']
    #allocation6 [shape = 's32[2]{0}', space=sflag, size = 0x8, scoped, tag = 'scoped memory for replicator_forward.1']
    #allocation7 [shape = 'u8[8192]{0}', space=vmem, size = 0x2000, scoped, tag = 'output window, operand 0']
    %12 = vsyncpa [#allocation6], 0
    %13 = vsyncpa [#allocation5], 0
    %s14 = scalar_lea.sflag [#allocation5], 1
    %15 = vsyncpa %s14, 0
    loop: start=0, step=1, limit=7
    $region2: #{replicator_forward.1} parent=1 // loop_pre_header
      _
    $region3: #{replicator_forward.1} parent=1 // loop_header
      %s17 = sphi 0, %s21
      %p18 = scmp.ge.s32.totalorder %s17, 7
      %s25 = sphi 0, %s25
      %s27 = sphi 0, %s25
      %s28 = sphi 0, %s27
      %s42 = sphi 0, %s28
      %s46 = sphi 0, %s46
      %s48 = sphi 0, %s46
      %s49 = sphi 0, %s48
      %s63 = sphi 0, %s49
      %s67 = sphi 0, %s67
      %s69 = sphi 0, %s67
      %s70 = sphi 0, %s69
      %s84 = sphi 0, %s70
      %s88 = sphi 0, %s88
      %s90 = sphi 0, %s88
      %s91 = sphi 0, %s90
      %s105 = sphi 0, %s91
      %s109 = sphi 0, %s109
      %s111 = sphi 0, %s109
      %s112 = sphi 0, %s111
      %s126 = sphi 0, %s112
      %s130 = sphi 0, %s130
      %s132 = sphi 0, %s130
      %s133 = sphi 0, %s132
      %s147 = sphi 0, %s133
      %s153 = sphi 0, %s155
      %s156 = sphi 0, %s153
      %s157 = sphi 0, %s156
      %s173 = sphi 0, %s157
    $region4: #{replicator_forward.1} parent=1 // loop_header_branch
      %20 = sbr.rel (%p18) target = $region8
    $region5: #{replicator_forward.1} parent=1 // loop_body
      %s22 = ssub.s32 %s17, 1
      %s23 = ssub.s32 %s17, 2
      %s24 = sadd.s32 %s17, 1
      %s26 = sadd.s32 %s25, 1
      %p29 = scmp.eq.s32.totalorder %s17, 4
      %p30 = scmp.ne.s32.totalorder %s25, %s27
      %p31 = scmp.eq.s32.totalorder %s17, 0
      %p32 = por %p30, %p31
      %p33 = scmp.ne.s32.totalorder %s25, %s27
      %p34 = scmp.eq.s32.totalorder %s22, 4
      %p35 = por %p33, %p34
      %p36 = scmp.ne.s32.totalorder %s27, %s28
      %p37 = scmp.eq.s32.totalorder %s22, 0
      %p38 = por %p36, %p37
      %p39 = scmp.ne.s32.totalorder %s27, %s28
      %p40 = scmp.eq.s32.totalorder %s23, 4
      %p41 = por %p39, %p40
      %p43 = scmp.ne.s32.totalorder %s28, %s42
      %p44 = scmp.eq.s32.totalorder %s23, 0
      %p45 = por %p43, %p44
      %s47 = sadd.s32 %s46, 1
      %p50 = scmp.eq.s32.totalorder %s17, 4
      %p51 = scmp.ne.s32.totalorder %s46, %s48
      %p52 = scmp.eq.s32.totalorder %s17, 0
      %p53 = por %p51, %p52
      %p54 = scmp.ne.s32.totalorder %s46, %s48
      %p55 = scmp.eq.s32.totalorder %s22, 4
      %p56 = por %p54, %p55
      %p57 = scmp.ne.s32.totalorder %s48, %s49
      %p58 = scmp.eq.s32.totalorder %s22, 0
      %p59 = por %p57, %p58
      %p60 = scmp.ne.s32.totalorder %s48, %s49
      %p61 = scmp.eq.s32.totalorder %s23, 4
      %p62 = por %p60, %p61
      %p64 = scmp.ne.s32.totalorder %s49, %s63
      %p65 = scmp.eq.s32.totalorder %s23, 0
      %p66 = por %p64, %p65
      %s68 = sadd.s32 %s67, 1
      %p71 = scmp.eq.s32.totalorder %s17, 4
      %p72 = scmp.ne.s32.totalorder %s67, %s69
      %p73 = scmp.eq.s32.totalorder %s17, 0
      %p74 = por %p72, %p73
      %p75 = scmp.ne.s32.totalorder %s67, %s69
      %p76 = scmp.eq.s32.totalorder %s22, 4
      %p77 = por %p75, %p76
      %p78 = scmp.ne.s32.totalorder %s69, %s70
      %p79 = scmp.eq.s32.totalorder %s22, 0
      %p80 = por %p78, %p79
      %p81 = scmp.ne.s32.totalorder %s69, %s70
      %p82 = scmp.eq.s32.totalorder %s23, 4
      %p83 = por %p81, %p82
      %p85 = scmp.ne.s32.totalorder %s70, %s84
      %p86 = scmp.eq.s32.totalorder %s23, 0
      %p87 = por %p85, %p86
      %s89 = sadd.s32 %s88, 1
      %p92 = scmp.eq.s32.totalorder %s17, 4
      %p93 = scmp.ne.s32.totalorder %s88, %s90
      %p94 = scmp.eq.s32.totalorder %s17, 0
      %p95 = por %p93, %p94
      %p96 = scmp.ne.s32.totalorder %s88, %s90
      %p97 = scmp.eq.s32.totalorder %s22, 4
      %p98 = por %p96, %p97
      %p99 = scmp.ne.s32.totalorder %s90, %s91
      %p100 = scmp.eq.s32.totalorder %s22, 0
      %p101 = por %p99, %p100
      %p102 = scmp.ne.s32.totalorder %s90, %s91
      %p103 = scmp.eq.s32.totalorder %s23, 4
      %p104 = por %p102, %p103
      %p106 = scmp.ne.s32.totalorder %s91, %s105
      %p107 = scmp.eq.s32.totalorder %s23, 0
      %p108 = por %p106, %p107
      %s110 = sadd.s32 %s109, 1
      %p113 = scmp.eq.s32.totalorder %s17, 4
      %p114 = scmp.ne.s32.totalorder %s109, %s111
      %p115 = scmp.eq.s32.totalorder %s17, 0
      %p116 = por %p114, %p115
      %p117 = scmp.ne.s32.totalorder %s109, %s111
      %p118 = scmp.eq.s32.totalorder %s22, 4
      %p119 = por %p117, %p118
      %p120 = scmp.ne.s32.totalorder %s111, %s112
      %p121 = scmp.eq.s32.totalorder %s22, 0
      %p122 = por %p120, %p121
      %p123 = scmp.ne.s32.totalorder %s111, %s112
      %p124 = scmp.eq.s32.totalorder %s23, 4
      %p125 = por %p123, %p124
      %p127 = scmp.ne.s32.totalorder %s112, %s126
      %p128 = scmp.eq.s32.totalorder %s23, 0
      %p129 = por %p127, %p128
      %s131 = sadd.s32 %s130, 1
      %p134 = scmp.eq.s32.totalorder %s17, 4
      %p135 = scmp.ne.s32.totalorder %s130, %s132
      %p136 = scmp.eq.s32.totalorder %s17, 0
      %p137 = por %p135, %p136
      %p138 = scmp.ne.s32.totalorder %s130, %s132
      %p139 = scmp.eq.s32.totalorder %s22, 4
      %p140 = por %p138, %p139
      %p141 = scmp.ne.s32.totalorder %s132, %s133
      %p142 = scmp.eq.s32.totalorder %s22, 0
      %p143 = por %p141, %p142
      %p144 = scmp.ne.s32.totalorder %s132, %s133
      %p145 = scmp.eq.s32.totalorder %s23, 4
      %p146 = por %p144, %p145
      %p148 = scmp.ne.s32.totalorder %s133, %s147
      %p149 = scmp.eq.s32.totalorder %s23, 0
      %p150 = por %p148, %p149
      %s151 = ssub.s32 %s17, %s24
      %p152 = scmp.eq.s32.totalorder %s151, 0
      %s154 = sadd.s32 %s153, 1
      %s155 = scalar_select %p152, %s153, %s154
      %p158 = pneg %p152
      %p159 = scmp.eq.s32.totalorder %s17, 4
      %p160 = por %p158, %p159
      %p161 = scmp.ne.s32.totalorder %s153, %s156
      %p162 = scmp.eq.s32.totalorder %s17, 0
      %p163 = por %p161, %p162
      %p164 = scmp.ne.s32.totalorder %s153, %s156
      %p165 = scmp.eq.s32.totalorder %s22, 4
      %p166 = por %p164, %p165
      %p167 = scmp.ne.s32.totalorder %s156, %s157
      %p168 = scmp.eq.s32.totalorder %s22, 0
      %p169 = por %p167, %p168
      %p170 = scmp.ne.s32.totalorder %s156, %s157
      %p171 = scmp.eq.s32.totalorder %s23, 4
      %p172 = por %p170, %p171
      %p174 = scmp.ne.s32.totalorder %s157, %s173
      %p175 = scmp.eq.s32.totalorder %s23, 0
      %p176 = por %p174, %p175
      %p177 = scmp.le.s32.totalorder 1, %s17
      %p178 = scmp.lt.s32.totalorder %s17, 6
      %p179 = pnand %p177, %p178
      %p180 = pneg %p179
      // Predicated region
      $region9: #{replicator_forward.1} parent=5 // pred_check
        _
      $region10: #{replicator_forward.1} parent=5 // pred_check_branch
        %182 = sbr.rel (%p179) target = $region12
      $region11: #{replicator_forward.1} parent=5 // pred_region
        %s183 = ssub.s32 %s17, 1
        // Predicated region
        $region13: #{replicator_forward.1} parent=11 // pred_check
          %p184 = pneg %p38
        $region14: #{replicator_forward.1} parent=11 // pred_check_branch
          %186 = sbr.rel (%p184) target = $region16
        $region15: #{replicator_forward.1} parent=11 // pred_region
          %188 = vsyncadd [#allocation6], 0
          %s190 = sshll.u32 %s0, 4
          %s191 = int_to_ptr.vmem [resolvable:$true] %s190
          %193 = dma.vmem_to_smem %s191, 16, [#allocation4], [#allocation6]
        $region16: #{replicator_forward.1} parent=11 // pred_fallthru
          _
        // Predicated region
        $region17: #{replicator_forward.1} parent=11 // pred_check
          %p194 = pneg %p59
        $region18: #{replicator_forward.1} parent=11 // pred_check_branch
          %196 = sbr.rel (%p194) target = $region20
        $region19: #{replicator_forward.1} parent=11 // pred_region
          _
        $region20: #{replicator_forward.1} parent=11 // pred_fallthru
          _
        // Predicated region
        $region21: #{replicator_forward.1} parent=11 // pred_check
          %p197 = pneg %p80
        $region22: #{replicator_forward.1} parent=11 // pred_check_branch
          %199 = sbr.rel (%p197) target = $region24
        $region23: #{replicator_forward.1} parent=11 // pred_region
          _
        $region24: #{replicator_forward.1} parent=11 // pred_fallthru
          _
        // Predicated region
        $region25: #{replicator_forward.1} parent=11 // pred_check
          %p200 = pneg %p101
        $region26: #{replicator_forward.1} parent=11 // pred_check_branch
          %202 = sbr.rel (%p200) target = $region28
        $region27: #{replicator_forward.1} parent=11 // pred_region
          _
        $region28: #{replicator_forward.1} parent=11 // pred_fallthru
          _
        // Predicated region
        $region29: #{replicator_forward.1} parent=11 // pred_check
          %p203 = pneg %p122
        $region30: #{replicator_forward.1} parent=11 // pred_check_branch
          %205 = sbr.rel (%p203) target = $region32
        $region31: #{replicator_forward.1} parent=11 // pred_region
          _
        $region32: #{replicator_forward.1} parent=11 // pred_fallthru
          _
        // Predicated region
        $region33: #{replicator_forward.1} parent=11 // pred_check
          %p206 = pneg %p143
        $region34: #{replicator_forward.1} parent=11 // pred_check_branch
          %208 = sbr.rel (%p206) target = $region36
        $region35: #{replicator_forward.1} parent=11 // pred_region
          _
        $region36: #{replicator_forward.1} parent=11 // pred_fallthru
          _
      $region12: #{replicator_forward.1} parent=5 // pred_fallthru
        _
      %p209 = scmp.lt.s32.totalorder %s17, 5
      // Predicated region
      $region37: #{replicator_forward.1} parent=5 // pred_check
        %p210 = pneg %p209
      $region38: #{replicator_forward.1} parent=5 // pred_check_branch
        %212 = sbr.rel (%p210) target = $region40
      $region39: #{replicator_forward.1} parent=5 // pred_region
        _
      $region40: #{replicator_forward.1} parent=5 // pred_fallthru
        _
      %p213 = scmp.le.s32.totalorder 1, %s17
      %p214 = scmp.lt.s32.totalorder %s17, 6
      %p215 = pnand %p213, %p214
      %p216 = pneg %p215
      // Predicated region
      $region41: #{replicator_forward.1} parent=5 // pred_check
        _
      $region42: #{replicator_forward.1} parent=5 // pred_check_branch
        %218 = sbr.rel (%p215) target = $region44
      $region43: #{replicator_forward.1} parent=5 // pred_region
        %s219 = ssub.s32 %s17, 1
        // Predicated region
        $region45: #{replicator_forward.1} parent=43 // pred_check
          %p220 = pneg %p38
        $region46: #{replicator_forward.1} parent=43 // pred_check_branch
          %222 = sbr.rel (%p220) target = $region48
        $region47: #{replicator_forward.1} parent=43 // pred_region
          %224 = dma.done [#allocation6], 16
        $region48: #{replicator_forward.1} parent=43 // pred_fallthru
          _
        %225 = sfence
        %p226 = pneg %p38
        %p227 = pneg %p35
        %p228 = pneg %p59
        %p229 = pneg %p56
        %p230 = pneg %p80
        %p231 = pneg %p77
        %p232 = pneg %p101
        %p233 = pneg %p98
        %p234 = pneg %p122
        %p235 = pneg %p119
        %p236 = pneg %p143
        %p237 = pneg %p140
        %p238 = pneg %p169
        %p239 = pneg %p166
        %s240 = sand.u32 %s156, 1
        %s241 = scalar_lea.sflag [#allocation5], %s240
        %s242 = sand.u32 %s156, 1
        %s243 = smul.addr %s242, 8
        %s244 = scalar_lea.vmem [#allocation7], %s243
        %p245 = scmp.eq.s32.totalorder %s22, 0
        // Predicated region
        $region49: #{replicator_forward.1} parent=43 // pred_check
          %p246 = pneg %p245
        $region50: #{replicator_forward.1} parent=43 // pred_check_branch
          %248 = sbr.rel (%p246) target = $region52
        $region51: #{replicator_forward.1} parent=43 // pred_region
          %v249 = vld [vmem:[%s1] sm:$0xff]
          %250 = vst [vmem:[#allocation2] sm:$0xff] %v249
        $region52: #{replicator_forward.1} parent=43 // pred_fallthru
          _
        %v251 = vld [vmem:[#allocation2] sm:$0xff]
        %252 = vst [vmem:[%s244] sm:$0xff] %v251
        %s253 = sadd.s32 %s22, 1
        %p254 = scmp.lt.s32.totalorder %s253, 5
        // Predicated region
        $region53: #{replicator_forward.1} parent=43 // pred_check
          %p255 = pneg %p254
        $region54: #{replicator_forward.1} parent=43 // pred_check_branch
          %257 = sbr.rel (%p255) target = $region56
        $region55: #{replicator_forward.1} parent=43 // pred_region
          %s258 = sld [smem:[#allocation4 + %s22]]
          %s259 = sld [smem:[#allocation3]]
          %v260 = vld [vmem:[#allocation2] sm:$0xff]
          %v262 = vrot.slane %v260, 1
          %v263 = vrot.slane %v260, 2
          %v264 = vrot.slane %v260, 3
          %v265 = vrot.slane %v260, 4
          %v266 = vrot.slane %v260, 5
          %v267 = vrot.slane %v260, 6
          %v268 = vrot.slane %v260, 7
          %v269 = vld [vmem:[%s3] sm:$0xff]
          %v270 = vld [vmem:[%s3 + $0x8] sm:$0xff]
          %v271 = vld [vmem:[%s3 + $0x10] sm:$0xff]
          %v272 = vld [vmem:[%s3 + $0x18] sm:$0xff]
          %v273 = vld [vmem:[%s3 + $0x20] sm:$0xff]
          %v274 = vld [vmem:[%s3 + $0x28] sm:$0xff]
          %v275 = vld [vmem:[%s3 + $0x30] sm:$0xff]
          %v276 = vld [vmem:[%s3 + $0x38] sm:$0xff]
          %v277 = vperm.slane %v260, 0
          %v278 = vperm.slane %v262, 0
          %v279 = vperm.slane %v263, 0
          %v280 = vperm.slane %v264, 0
          %v281 = vperm.slane %v265, 0
          %v282 = vperm.slane %v266, 0
          %v283 = vperm.slane %v267, 0
          %v284 = vperm.slane %v268, 0
          %294 = vset.pattern.permute.xlu0 0
          %295 = vperm.xlu0 %294, %v269
          %v296 = vpop.permute.xlu0 %295
          %299 = vset.pattern.permute.xlu0 0
          %300 = vperm.xlu0 %299, %v270
          %v301 = vpop.permute.xlu0 %300
          %304 = vset.pattern.permute.xlu0 0
          %305 = vperm.xlu0 %304, %v271
          %v306 = vpop.permute.xlu0 %305
          %309 = vset.pattern.permute.xlu0 0
          %310 = vperm.xlu0 %309, %v272
          %v311 = vpop.permute.xlu0 %310
          %314 = vset.pattern.permute.xlu0 0
          %315 = vperm.xlu0 %314, %v273
          %v316 = vpop.permute.xlu0 %315
          %319 = vset.pattern.permute.xlu0 0
          %320 = vperm.xlu0 %319, %v274
          %v321 = vpop.permute.xlu0 %320
          %324 = vset.pattern.permute.xlu0 0
          %325 = vperm.xlu0 %324, %v275
          %v326 = vpop.permute.xlu0 %325
          %329 = vset.pattern.permute.xlu0 0
          %330 = vperm.xlu0 %329, %v276
          %v331 = vpop.permute.xlu0 %330
          %v333 = vmul.f32 %v277, %v296
          %v334 = vmul.f32 %v277, %v301
          %v335 = vmul.f32 %v277, %v306
          %v336 = vmul.f32 %v277, %v311
          %v337 = vmul.f32 %v277, %v316
          %v338 = vmul.f32 %v277, %v321
          %v339 = vmul.f32 %v277, %v326
          %v340 = vmul.f32 %v277, %v331
          %v341 = vmul.f32 %v278, %v296
          %v342 = vmul.f32 %v278, %v301
          %v343 = vmul.f32 %v278, %v306
          %v344 = vmul.f32 %v278, %v311
          %v345 = vmul.f32 %v278, %v316
          %v346 = vmul.f32 %v278, %v321
          %v347 = vmul.f32 %v278, %v326
          %v348 = vmul.f32 %v278, %v331
          %v349 = vmul.f32 %v279, %v296
          %v350 = vmul.f32 %v279, %v301
          %v351 = vmul.f32 %v279, %v306
          %v352 = vmul.f32 %v279, %v311
          %v353 = vmul.f32 %v279, %v316
          %v354 = vmul.f32 %v279, %v321
          %v355 = vmul.f32 %v279, %v326
          %v356 = vmul.f32 %v279, %v331
          %v357 = vmul.f32 %v280, %v296
          %v358 = vmul.f32 %v280, %v301
          %v359 = vmul.f32 %v280, %v306
          %v360 = vmul.f32 %v280, %v311
          %v361 = vmul.f32 %v280, %v316
          %v362 = vmul.f32 %v280, %v321
          %v363 = vmul.f32 %v280, %v326
          %v364 = vmul.f32 %v280, %v331
          %v365 = vmul.f32 %v281, %v296
          %v366 = vmul.f32 %v281, %v301
          %v367 = vmul.f32 %v281, %v306
          %v368 = vmul.f32 %v281, %v311
          %v369 = vmul.f32 %v281, %v316
          %v370 = vmul.f32 %v281, %v321
          %v371 = vmul.f32 %v281, %v326
          %v372 = vmul.f32 %v281, %v331
          %v373 = vmul.f32 %v282, %v296
          %v374 = vmul.f32 %v282, %v301
          %v375 = vmul.f32 %v282, %v306
          %v376 = vmul.f32 %v282, %v311
          %v377 = vmul.f32 %v282, %v316
          %v378 = vmul.f32 %v282, %v321
          %v379 = vmul.f32 %v282, %v326
          %v380 = vmul.f32 %v282, %v331
          %v381 = vmul.f32 %v283, %v296
          %v382 = vmul.f32 %v283, %v301
          %v383 = vmul.f32 %v283, %v306
          %v384 = vmul.f32 %v283, %v311
          %v385 = vmul.f32 %v283, %v316
          %v386 = vmul.f32 %v283, %v321
          %v387 = vmul.f32 %v283, %v326
          %v388 = vmul.f32 %v283, %v331
          %v389 = vmul.f32 %v284, %v296
          %v390 = vmul.f32 %v284, %v301
          %v391 = vmul.f32 %v284, %v306
          %v392 = vmul.f32 %v284, %v311
          %v393 = vmul.f32 %v284, %v316
          %v394 = vmul.f32 %v284, %v321
          %v395 = vmul.f32 %v284, %v326
          %v396 = vmul.f32 %v284, %v331
          %v397 = vld [vmem:[%s2] sm:$0xff]
          %v398 = vld [vmem:[%s2 + $0x8] sm:$0xff]
          %v399 = vld [vmem:[%s2 + $0x10] sm:$0xff]
          %v400 = vld [vmem:[%s2 + $0x18] sm:$0xff]
          %v401 = vld [vmem:[%s2 + $0x20] sm:$0xff]
          %v402 = vld [vmem:[%s2 + $0x28] sm:$0xff]
          %v403 = vld [vmem:[%s2 + $0x30] sm:$0xff]
          %v404 = vld [vmem:[%s2 + $0x38] sm:$0xff]
          %v405 = vld [vmem:[%s2 + $0x40] sm:$0xff]
          %v406 = vld [vmem:[%s2 + $0x48] sm:$0xff]
          %v407 = vld [vmem:[%s2 + $0x50] sm:$0xff]
          %v408 = vld [vmem:[%s2 + $0x58] sm:$0xff]
          %v409 = vld [vmem:[%s2 + $0x60] sm:$0xff]
          %v410 = vld [vmem:[%s2 + $0x68] sm:$0xff]
          %v411 = vld [vmem:[%s2 + $0x70] sm:$0xff]
          %v412 = vld [vmem:[%s2 + $0x78] sm:$0xff]
          %v413 = vld [vmem:[%s2 + $0x80] sm:$0xff]
          %v414 = vld [vmem:[%s2 + $0x88] sm:$0xff]
          %v415 = vld [vmem:[%s2 + $0x90] sm:$0xff]
          %v416 = vld [vmem:[%s2 + $0x98] sm:$0xff]
          %v417 = vld [vmem:[%s2 + $0xa0] sm:$0xff]
          %v418 = vld [vmem:[%s2 + $0xa8] sm:$0xff]
          %v419 = vld [vmem:[%s2 + $0xb0] sm:$0xff]
          %v420 = vld [vmem:[%s2 + $0xb8] sm:$0xff]
          %v421 = vld [vmem:[%s2 + $0xc0] sm:$0xff]
          %v422 = vld [vmem:[%s2 + $0xc8] sm:$0xff]
          %v423 = vld [vmem:[%s2 + $0xd0] sm:$0xff]
          %v424 = vld [vmem:[%s2 + $0xd8] sm:$0xff]
          %v425 = vld [vmem:[%s2 + $0xe0] sm:$0xff]
          %v426 = vld [vmem:[%s2 + $0xe8] sm:$0xff]
          %v427 = vld [vmem:[%s2 + $0xf0] sm:$0xff]
          %v428 = vld [vmem:[%s2 + $0xf8] sm:$0xff]
          %v429 = vld [vmem:[%s2 + $0x100] sm:$0xff]
          %v430 = vld [vmem:[%s2 + $0x108] sm:$0xff]
          %v431 = vld [vmem:[%s2 + $0x110] sm:$0xff]
          %v432 = vld [vmem:[%s2 + $0x118] sm:$0xff]
          %v433 = vld [vmem:[%s2 + $0x120] sm:$0xff]
          %v434 = vld [vmem:[%s2 + $0x128] sm:$0xff]
          %v435 = vld [vmem:[%s2 + $0x130] sm:$0xff]
          %v436 = vld [vmem:[%s2 + $0x138] sm:$0xff]
          %v437 = vld [vmem:[%s2 + $0x140] sm:$0xff]
          %v438 = vld [vmem:[%s2 + $0x148] sm:$0xff]
          %v439 = vld [vmem:[%s2 + $0x150] sm:$0xff]
          %v440 = vld [vmem:[%s2 + $0x158] sm:$0xff]
          %v441 = vld [vmem:[%s2 + $0x160] sm:$0xff]
          %v442 = vld [vmem:[%s2 + $0x168] sm:$0xff]
          %v443 = vld [vmem:[%s2 + $0x170] sm:$0xff]
          %v444 = vld [vmem:[%s2 + $0x178] sm:$0xff]
          %v445 = vld [vmem:[%s2 + $0x180] sm:$0xff]
          %v446 = vld [vmem:[%s2 + $0x188] sm:$0xff]
          %v447 = vld [vmem:[%s2 + $0x190] sm:$0xff]
          %v448 = vld [vmem:[%s2 + $0x198] sm:$0xff]
          %v449 = vld [vmem:[%s2 + $0x1a0] sm:$0xff]
          %v450 = vld [vmem:[%s2 + $0x1a8] sm:$0xff]
          %v451 = vld [vmem:[%s2 + $0x1b0] sm:$0xff]
          %v452 = vld [vmem:[%s2 + $0x1b8] sm:$0xff]
          %v453 = vld [vmem:[%s2 + $0x1c0] sm:$0xff]
          %v454 = vld [vmem:[%s2 + $0x1c8] sm:$0xff]
          %v455 = vld [vmem:[%s2 + $0x1d0] sm:$0xff]
          %v456 = vld [vmem:[%s2 + $0x1d8] sm:$0xff]
          %v457 = vld [vmem:[%s2 + $0x1e0] sm:$0xff]
          %v458 = vld [vmem:[%s2 + $0x1e8] sm:$0xff]
          %v459 = vld [vmem:[%s2 + $0x1f0] sm:$0xff]
          %v460 = vld [vmem:[%s2 + $0x1f8] sm:$0xff]
          %v461 = vadd.f32 %v333, %v397
          %v462 = vadd.f32 %v334, %v398
          %v463 = vadd.f32 %v335, %v399
          %v464 = vadd.f32 %v336, %v400
          %v465 = vadd.f32 %v337, %v401
          %v466 = vadd.f32 %v338, %v402
          %v467 = vadd.f32 %v339, %v403
          %v468 = vadd.f32 %v340, %v404
          %v469 = vadd.f32 %v341, %v405
          %v470 = vadd.f32 %v342, %v406
          %v471 = vadd.f32 %v343, %v407
          %v472 = vadd.f32 %v344, %v408
          %v473 = vadd.f32 %v345, %v409
          %v474 = vadd.f32 %v346, %v410
          %v475 = vadd.f32 %v347, %v411
          %v476 = vadd.f32 %v348, %v412
          %v477 = vadd.f32 %v349, %v413
          %v478 = vadd.f32 %v350, %v414
          %v479 = vadd.f32 %v351, %v415
          %v480 = vadd.f32 %v352, %v416
          %v481 = vadd.f32 %v353, %v417
          %v482 = vadd.f32 %v354, %v418
          %v483 = vadd.f32 %v355, %v419
          %v484 = vadd.f32 %v356, %v420
          %v485 = vadd.f32 %v357, %v421
          %v486 = vadd.f32 %v358, %v422
          %v487 = vadd.f32 %v359, %v423
          %v488 = vadd.f32 %v360, %v424
          %v489 = vadd.f32 %v361, %v425
          %v490 = vadd.f32 %v362, %v426
          %v491 = vadd.f32 %v363, %v427
          %v492 = vadd.f32 %v364, %v428
          %v493 = vadd.f32 %v365, %v429
          %v494 = vadd.f32 %v366, %v430
          %v495 = vadd.f32 %v367, %v431
          %v496 = vadd.f32 %v368, %v432
          %v497 = vadd.f32 %v369, %v433
          %v498 = vadd.f32 %v370, %v434
          %v499 = vadd.f32 %v371, %v435
          %v500 = vadd.f32 %v372, %v436
          %v501 = vadd.f32 %v373, %v437
          %v502 = vadd.f32 %v374, %v438
          %v503 = vadd.f32 %v375, %v439
          %v504 = vadd.f32 %v376, %v440
          %v505 = vadd.f32 %v377, %v441
          %v506 = vadd.f32 %v378, %v442
          %v507 = vadd.f32 %v379, %v443
          %v508 = vadd.f32 %v380, %v444
          %v509 = vadd.f32 %v381, %v445
          %v510 = vadd.f32 %v382, %v446
          %v511 = vadd.f32 %v383, %v447
          %v512 = vadd.f32 %v384, %v448
          %v513 = vadd.f32 %v385, %v449
          %v514 = vadd.f32 %v386, %v450
          %v515 = vadd.f32 %v387, %v451
          %v516 = vadd.f32 %v388, %v452
          %v517 = vadd.f32 %v389, %v453
          %v518 = vadd.f32 %v390, %v454
          %v519 = vadd.f32 %v391, %v455
          %v520 = vadd.f32 %v392, %v456
          %v521 = vadd.f32 %v393, %v457
          %v522 = vadd.f32 %v394, %v458
          %v523 = vadd.f32 %v395, %v459
          %v524 = vadd.f32 %v396, %v460
          %v525 = vtanh.pop %v461
          %v526 = vtanh.pop %v462
          %v527 = vtanh.pop %v463
          %v528 = vtanh.pop %v464
          %v529 = vtanh.pop %v465
          %v530 = vtanh.pop %v466
          %v531 = vtanh.pop %v467
          %v532 = vtanh.pop %v468
          %v533 = vtanh.pop %v469
          %v534 = vtanh.pop %v470
          %v535 = vtanh.pop %v471
          %v536 = vtanh.pop %v472
          %v537 = vtanh.pop %v473
          %v538 = vtanh.pop %v474
          %v539 = vtanh.pop %v475
          %v540 = vtanh.pop %v476
          %v541 = vtanh.pop %v477
          %v542 = vtanh.pop %v478
          %v543 = vtanh.pop %v479
          %v544 = vtanh.pop %v480
          %v545 = vtanh.pop %v481
          %v546 = vtanh.pop %v482
          %v547 = vtanh.pop %v483
          %v548 = vtanh.pop %v484
          %v549 = vtanh.pop %v485
          %v550 = vtanh.pop %v486
          %v551 = vtanh.pop %v487
          %v552 = vtanh.pop %v488
          %v553 = vtanh.pop %v489
          %v554 = vtanh.pop %v490
          %v555 = vtanh.pop %v491
          %v556 = vtanh.pop %v492
          %v557 = vtanh.pop %v493
          %v558 = vtanh.pop %v494
          %v559 = vtanh.pop %v495
          %v560 = vtanh.pop %v496
          %v561 = vtanh.pop %v497
          %v562 = vtanh.pop %v498
          %v563 = vtanh.pop %v499
          %v564 = vtanh.pop %v500
          %v565 = vtanh.pop %v501
          %v566 = vtanh.pop %v502
          %v567 = vtanh.pop %v503
          %v568 = vtanh.pop %v504
          %v569 = vtanh.pop %v505
          %v570 = vtanh.pop %v506
          %v571 = vtanh.pop %v507
          %v572 = vtanh.pop %v508
          %v573 = vtanh.pop %v509
          %v574 = vtanh.pop %v510
          %v575 = vtanh.pop %v511
          %v576 = vtanh.pop %v512
          %v577 = vtanh.pop %v513
          %v578 = vtanh.pop %v514
          %v579 = vtanh.pop %v515
          %v580 = vtanh.pop %v516
          %v581 = vtanh.pop %v517
          %v582 = vtanh.pop %v518
          %v583 = vtanh.pop %v519
          %v584 = vtanh.pop %v520
          %v585 = vtanh.pop %v521
          %v586 = vtanh.pop %v522
          %v587 = vtanh.pop %v523
          %v588 = vtanh.pop %v524
          %v589 = vld [vmem:[%s4] sm:$0xff]
          %v590 = vld [vmem:[%s4 + $0x8] sm:$0xff]
          %v591 = vld [vmem:[%s4 + $0x10] sm:$0xff]
          %v592 = vld [vmem:[%s4 + $0x18] sm:$0xff]
          %v593 = vld [vmem:[%s4 + $0x20] sm:$0xff]
          %v594 = vld [vmem:[%s4 + $0x28] sm:$0xff]
          %v595 = vld [vmem:[%s4 + $0x30] sm:$0xff]
          %v596 = vld [vmem:[%s4 + $0x38] sm:$0xff]
          %598 = vset.pattern.permute.xlu0 0
          %599 = vperm.xlu0 %598, %v589
          %v600 = vpop.permute.xlu0 %599
          %603 = vset.pattern.permute.xlu0 0
          %604 = vperm.xlu0 %603, %v590
          %v605 = vpop.permute.xlu0 %604
          %608 = vset.pattern.permute.xlu0 0
          %609 = vperm.xlu0 %608, %v591
          %v610 = vpop.permute.xlu0 %609
          %613 = vset.pattern.permute.xlu0 0
          %614 = vperm.xlu0 %613, %v592
          %v615 = vpop.permute.xlu0 %614
          %618 = vset.pattern.permute.xlu0 0
          %619 = vperm.xlu0 %618, %v593
          %v620 = vpop.permute.xlu0 %619
          %623 = vset.pattern.permute.xlu0 0
          %624 = vperm.xlu0 %623, %v594
          %v625 = vpop.permute.xlu0 %624
          %628 = vset.pattern.permute.xlu0 0
          %629 = vperm.xlu0 %628, %v595
          %v630 = vpop.permute.xlu0 %629
          %633 = vset.pattern.permute.xlu0 0
          %634 = vperm.xlu0 %633, %v596
          %v635 = vpop.permute.xlu0 %634
          %v637 = vmul.f32 %v525, %v600
          %v638 = vmul.f32 %v526, %v605
          %v639 = vmul.f32 %v527, %v610
          %v640 = vmul.f32 %v528, %v615
          %v641 = vmul.f32 %v529, %v620
          %v642 = vmul.f32 %v530, %v625
          %v643 = vmul.f32 %v531, %v630
          %v644 = vmul.f32 %v532, %v635
          %v645 = vmul.f32 %v533, %v600
          %v646 = vmul.f32 %v534, %v605
          %v647 = vmul.f32 %v535, %v610
          %v648 = vmul.f32 %v536, %v615
          %v649 = vmul.f32 %v537, %v620
          %v650 = vmul.f32 %v538, %v625
          %v651 = vmul.f32 %v539, %v630
          %v652 = vmul.f32 %v540, %v635
          %v653 = vmul.f32 %v541, %v600
          %v654 = vmul.f32 %v542, %v605
          %v655 = vmul.f32 %v543, %v610
          %v656 = vmul.f32 %v544, %v615
          %v657 = vmul.f32 %v545, %v620
          %v658 = vmul.f32 %v546, %v625
          %v659 = vmul.f32 %v547, %v630
          %v660 = vmul.f32 %v548, %v635
          %v661 = vmul.f32 %v549, %v600
          %v662 = vmul.f32 %v550, %v605
          %v663 = vmul.f32 %v551, %v610
          %v664 = vmul.f32 %v552, %v615
          %v665 = vmul.f32 %v553, %v620
          %v666 = vmul.f32 %v554, %v625
          %v667 = vmul.f32 %v555, %v630
          %v668 = vmul.f32 %v556, %v635
          %v669 = vmul.f32 %v557, %v600
          %v670 = vmul.f32 %v558, %v605
          %v671 = vmul.f32 %v559, %v610
          %v672 = vmul.f32 %v560, %v615
          %v673 = vmul.f32 %v561, %v620
          %v674 = vmul.f32 %v562, %v625
          %v675 = vmul.f32 %v563, %v630
          %v676 = vmul.f32 %v564, %v635
          %v677 = vmul.f32 %v565, %v600
          %v678 = vmul.f32 %v566, %v605
          %v679 = vmul.f32 %v567, %v610
          %v680 = vmul.f32 %v568, %v615
          %v681 = vmul.f32 %v569, %v620
          %v682 = vmul.f32 %v570, %v625
          %v683 = vmul.f32 %v571, %v630
          %v684 = vmul.f32 %v572, %v635
          %v685 = vmul.f32 %v573, %v600
          %v686 = vmul.f32 %v574, %v605
          %v687 = vmul.f32 %v575, %v610
          %v688 = vmul.f32 %v576, %v615
          %v689 = vmul.f32 %v577, %v620
          %v690 = vmul.f32 %v578, %v625
          %v691 = vmul.f32 %v579, %v630
          %v692 = vmul.f32 %v580, %v635
          %v693 = vmul.f32 %v581, %v600
          %v694 = vmul.f32 %v582, %v605
          %v695 = vmul.f32 %v583, %v610
          %v696 = vmul.f32 %v584, %v615
          %v697 = vmul.f32 %v585, %v620
          %v698 = vmul.f32 %v586, %v625
          %v699 = vmul.f32 %v587, %v630
          %v700 = vmul.f32 %v588, %v635
          %v701 = vadd.f32 %v637, %v638
          %v702 = vadd.f32 %v701, %v639
          %v703 = vadd.f32 %v702, %v640
          %v704 = vadd.f32 %v703, %v641
          %v705 = vadd.f32 %v704, %v642
          %v706 = vadd.f32 %v705, %v643
          %v707 = vadd.f32 %v706, %v644
          %v708 = vrot.slane %v707, 4
          %v709 = vadd.f32 %v707, %v708
          %v710 = vrot.slane %v709, 2
          %v711 = vadd.f32 %v709, %v710
          %v712 = vrot.slane %v711, 1
          %v713 = vadd.f32 %v711, %v712
          %v714 = vadd.f32 %v645, %v646
          %v715 = vadd.f32 %v714, %v647
          %v716 = vadd.f32 %v715, %v648
          %v717 = vadd.f32 %v716, %v649
          %v718 = vadd.f32 %v717, %v650
          %v719 = vadd.f32 %v718, %v651
          %v720 = vadd.f32 %v719, %v652
          %v721 = vrot.slane %v720, 4
          %v722 = vadd.f32 %v720, %v721
          %v723 = vrot.slane %v722, 2
          %v724 = vadd.f32 %v722, %v723
          %v725 = vrot.slane %v724, 1
          %v726 = vadd.f32 %v724, %v725
          %v727 = vadd.f32 %v653, %v654
          %v728 = vadd.f32 %v727, %v655
          %v729 = vadd.f32 %v728, %v656
          %v730 = vadd.f32 %v729, %v657
          %v731 = vadd.f32 %v730, %v658
          %v732 = vadd.f32 %v731, %v659
          %v733 = vadd.f32 %v732, %v660
          %v734 = vrot.slane %v733, 4
          %v735 = vadd.f32 %v733, %v734
          %v736 = vrot.slane %v735, 2
          %v737 = vadd.f32 %v735, %v736
          %v738 = vrot.slane %v737, 1
          %v739 = vadd.f32 %v737, %v738
          %v740 = vadd.f32 %v661, %v662
          %v741 = vadd.f32 %v740, %v663
          %v742 = vadd.f32 %v741, %v664
          %v743 = vadd.f32 %v742, %v665
          %v744 = vadd.f32 %v743, %v666
          %v745 = vadd.f32 %v744, %v667
          %v746 = vadd.f32 %v745, %v668
          %v747 = vrot.slane %v746, 4
          %v748 = vadd.f32 %v746, %v747
          %v749 = vrot.slane %v748, 2
          %v750 = vadd.f32 %v748, %v749
          %v751 = vrot.slane %v750, 1
          %v752 = vadd.f32 %v750, %v751
          %v753 = vadd.f32 %v669, %v670
          %v754 = vadd.f32 %v753, %v671
          %v755 = vadd.f32 %v754, %v672
          %v756 = vadd.f32 %v755, %v673
          %v757 = vadd.f32 %v756, %v674
          %v758 = vadd.f32 %v757, %v675
          %v759 = vadd.f32 %v758, %v676
          %v760 = vrot.slane %v759, 4
          %v761 = vadd.f32 %v759, %v760
          %v762 = vrot.slane %v761, 2
          %v763 = vadd.f32 %v761, %v762
          %v764 = vrot.slane %v763, 1
          %v765 = vadd.f32 %v763, %v764
          %v766 = vadd.f32 %v677, %v678
          %v767 = vadd.f32 %v766, %v679
          %v768 = vadd.f32 %v767, %v680
          %v769 = vadd.f32 %v768, %v681
          %v770 = vadd.f32 %v769, %v682
          %v771 = vadd.f32 %v770, %v683
          %v772 = vadd.f32 %v771, %v684
          %v773 = vrot.slane %v772, 4
          %v774 = vadd.f32 %v772, %v773
          %v775 = vrot.slane %v774, 2
          %v776 = vadd.f32 %v774, %v775
          %v777 = vrot.slane %v776, 1
          %v778 = vadd.f32 %v776, %v777
          %v779 = vadd.f32 %v685, %v686
          %v780 = vadd.f32 %v779, %v687
          %v781 = vadd.f32 %v780, %v688
          %v782 = vadd.f32 %v781, %v689
          %v783 = vadd.f32 %v782, %v690
          %v784 = vadd.f32 %v783, %v691
          %v785 = vadd.f32 %v784, %v692
          %v786 = vrot.slane %v785, 4
          %v787 = vadd.f32 %v785, %v786
          %v788 = vrot.slane %v787, 2
          %v789 = vadd.f32 %v787, %v788
          %v790 = vrot.slane %v789, 1
          %v791 = vadd.f32 %v789, %v790
          %v792 = vadd.f32 %v693, %v694
          %v793 = vadd.f32 %v792, %v695
          %v794 = vadd.f32 %v793, %v696
          %v795 = vadd.f32 %v794, %v697
          %v796 = vadd.f32 %v795, %v698
          %v797 = vadd.f32 %v796, %v699
          %v798 = vadd.f32 %v797, %v700
          %v799 = vrot.slane %v798, 4
          %v800 = vadd.f32 %v798, %v799
          %v801 = vrot.slane %v800, 2
          %v802 = vadd.f32 %v800, %v801
          %v803 = vrot.slane %v802, 1
          %v804 = vadd.f32 %v802, %v803
          %v805 = vstv %s259
          %v806 = vadd.f32 %v713, %v805
          %v807 = vadd.f32 %v726, %v805
          %v808 = vadd.f32 %v739, %v805
          %v809 = vadd.f32 %v752, %v805
          %v810 = vadd.f32 %v765, %v805
          %v811 = vadd.f32 %v778, %v805
          %v812 = vadd.f32 %v791, %v805
          %v813 = vadd.f32 %v804, %v805
          %vm822 = vcmask 1041409
          %v823 = vsel %vm822, %v807, %v806
          %vm824 = vcmask 1042434
          %v825 = vsel %vm824, %v808, %v823
          %vm826 = vcmask 1043459
          %v827 = vsel %vm826, %v809, %v825
          %vm828 = vcmask 1044484
          %v829 = vsel %vm828, %v810, %v827
          %vm830 = vcmask 1045509
          %v831 = vsel %vm830, %v811, %v829
          %vm832 = vcmask 1046534
          %v833 = vsel %vm832, %v812, %v831
          %vm834 = vcmask 1047559
          %v835 = vsel %vm834, %v813, %v833
          %v837 = vmul.f32 %v260, %v835
          %838 = vadd.xlane.f32.xlu0 %v837
          %v839 = vpop.xlane.xlu0 %838
          %v841 = vrot.slane %v839, 1
          %v842 = vrot.slane %v839, 2
          %v843 = vrot.slane %v839, 3
          %v844 = vrot.slane %v839, 4
          %v845 = vrot.slane %v839, 5
          %v846 = vrot.slane %v839, 6
          %v847 = vrot.slane %v839, 7
          %v856 = vsub.f32 %v806, %v839
          %v857 = vsub.f32 %v807, %v841
          %v858 = vsub.f32 %v808, %v842
          %v859 = vsub.f32 %v809, %v843
          %v860 = vsub.f32 %v810, %v844
          %v861 = vsub.f32 %v811, %v845
          %v862 = vsub.f32 %v812, %v846
          %v863 = vsub.f32 %v813, %v847
          %v872 = vrot.slane %v857, 7
          %v873 = vsel %vm822, %v872, %v856
          %v874 = vrot.slane %v858, 6
          %v875 = vsel %vm824, %v874, %v873
          %v876 = vrot.slane %v859, 5
          %v877 = vsel %vm826, %v876, %v875
          %v878 = vrot.slane %v860, 4
          %v879 = vsel %vm828, %v878, %v877
          %v880 = vrot.slane %v861, 3
          %v881 = vsel %vm830, %v880, %v879
          %v882 = vrot.slane %v862, 2
          %v883 = vsel %vm832, %v882, %v881
          %v884 = vrot.slane %v863, 1
          %v885 = vsel %vm834, %v884, %v883
          %v887 = vmul.f32 %v260, %v885
          %s888 = smul.f32 %s258, 0.5
          %v889 = vstv %s888
          %v890 = vmul.f32 %v889, %v887
          %v891 = vadd.f32 %v260, %v890
          %v893 = vrot.slane %v891, 1
          %v894 = vrot.slane %v891, 2
          %v895 = vrot.slane %v891, 3
          %v896 = vrot.slane %v891, 4
          %v897 = vrot.slane %v891, 5
          %v898 = vrot.slane %v891, 6
          %v899 = vrot.slane %v891, 7
          %v900 = vperm.slane %v891, 0
          %v901 = vperm.slane %v893, 0
          %v902 = vperm.slane %v894, 0
          %v903 = vperm.slane %v895, 0
          %v904 = vperm.slane %v896, 0
          %v905 = vperm.slane %v897, 0
          %v906 = vperm.slane %v898, 0
          %v907 = vperm.slane %v899, 0
          %v916 = vmul.f32 %v900, %v296
          %v917 = vmul.f32 %v900, %v301
          %v918 = vmul.f32 %v900, %v306
          %v919 = vmul.f32 %v900, %v311
          %v920 = vmul.f32 %v900, %v316
          %v921 = vmul.f32 %v900, %v321
          %v922 = vmul.f32 %v900, %v326
          %v923 = vmul.f32 %v900, %v331
          %v924 = vmul.f32 %v901, %v296
          %v925 = vmul.f32 %v901, %v301
          %v926 = vmul.f32 %v901, %v306
          %v927 = vmul.f32 %v901, %v311
          %v928 = vmul.f32 %v901, %v316
          %v929 = vmul.f32 %v901, %v321
          %v930 = vmul.f32 %v901, %v326
          %v931 = vmul.f32 %v901, %v331
          %v932 = vmul.f32 %v902, %v296
          %v933 = vmul.f32 %v902, %v301
          %v934 = vmul.f32 %v902, %v306
          %v935 = vmul.f32 %v902, %v311
          %v936 = vmul.f32 %v902, %v316
          %v937 = vmul.f32 %v902, %v321
          %v938 = vmul.f32 %v902, %v326
          %v939 = vmul.f32 %v902, %v331
          %v940 = vmul.f32 %v903, %v296
          %v941 = vmul.f32 %v903, %v301
          %v942 = vmul.f32 %v903, %v306
          %v943 = vmul.f32 %v903, %v311
          %v944 = vmul.f32 %v903, %v316
          %v945 = vmul.f32 %v903, %v321
          %v946 = vmul.f32 %v903, %v326
          %v947 = vmul.f32 %v903, %v331
          %v948 = vmul.f32 %v904, %v296
          %v949 = vmul.f32 %v904, %v301
          %v950 = vmul.f32 %v904, %v306
          %v951 = vmul.f32 %v904, %v311
          %v952 = vmul.f32 %v904, %v316
          %v953 = vmul.f32 %v904, %v321
          %v954 = vmul.f32 %v904, %v326
          %v955 = vmul.f32 %v904, %v331
          %v956 = vmul.f32 %v905, %v296
          %v957 = vmul.f32 %v905, %v301
          %v958 = vmul.f32 %v905, %v306
          %v959 = vmul.f32 %v905, %v311
          %v960 = vmul.f32 %v905, %v316
          %v961 = vmul.f32 %v905, %v321
          %v962 = vmul.f32 %v905, %v326
          %v963 = vmul.f32 %v905, %v331
          %v964 = vmul.f32 %v906, %v296
          %v965 = vmul.f32 %v906, %v301
          %v966 = vmul.f32 %v906, %v306
          %v967 = vmul.f32 %v906, %v311
          %v968 = vmul.f32 %v906, %v316
          %v969 = vmul.f32 %v906, %v321
          %v970 = vmul.f32 %v906, %v326
          %v971 = vmul.f32 %v906, %v331
          %v972 = vmul.f32 %v907, %v296
          %v973 = vmul.f32 %v907, %v301
          %v974 = vmul.f32 %v907, %v306
          %v975 = vmul.f32 %v907, %v311
          %v976 = vmul.f32 %v907, %v316
          %v977 = vmul.f32 %v907, %v321
          %v978 = vmul.f32 %v907, %v326
          %v979 = vmul.f32 %v907, %v331
          %v980 = vadd.f32 %v916, %v397
          %v981 = vadd.f32 %v917, %v398
          %v982 = vadd.f32 %v918, %v399
          %v983 = vadd.f32 %v919, %v400
          %v984 = vadd.f32 %v920, %v401
          %v985 = vadd.f32 %v921, %v402
          %v986 = vadd.f32 %v922, %v403
          %v987 = vadd.f32 %v923, %v404
          %v988 = vadd.f32 %v924, %v405
          %v989 = vadd.f32 %v925, %v406
          %v990 = vadd.f32 %v926, %v407
          %v991 = vadd.f32 %v927, %v408
          %v992 = vadd.f32 %v928, %v409
          %v993 = vadd.f32 %v929, %v410
          %v994 = vadd.f32 %v930, %v411
          %v995 = vadd.f32 %v931, %v412
          %v996 = vadd.f32 %v932, %v413
          %v997 = vadd.f32 %v933, %v414
          %v998 = vadd.f32 %v934, %v415
          %v999 = vadd.f32 %v935, %v416
          %v1000 = vadd.f32 %v936, %v417
          %v1001 = vadd.f32 %v937, %v418
          %v1002 = vadd.f32 %v938, %v419
          %v1003 = vadd.f32 %v939, %v420
          %v1004 = vadd.f32 %v940, %v421
          %v1005 = vadd.f32 %v941, %v422
          %v1006 = vadd.f32 %v942, %v423
          %v1007 = vadd.f32 %v943, %v424
          %v1008 = vadd.f32 %v944, %v425
          %v1009 = vadd.f32 %v945, %v426
          %v1010 = vadd.f32 %v946, %v427
          %v1011 = vadd.f32 %v947, %v428
          %v1012 = vadd.f32 %v948, %v429
          %v1013 = vadd.f32 %v949, %v430
          %v1014 = vadd.f32 %v950, %v431
          %v1015 = vadd.f32 %v951, %v432
          %v1016 = vadd.f32 %v952, %v433
          %v1017 = vadd.f32 %v953, %v434
          %v1018 = vadd.f32 %v954, %v435
          %v1019 = vadd.f32 %v955, %v436
          %v1020 = vadd.f32 %v956, %v437
          %v1021 = vadd.f32 %v957, %v438
          %v1022 = vadd.f32 %v958, %v439
          %v1023 = vadd.f32 %v959, %v440
          %v1024 = vadd.f32 %v960, %v441
          %v1025 = vadd.f32 %v961, %v442
          %v1026 = vadd.f32 %v962, %v443
          %v1027 = vadd.f32 %v963, %v444
          %v1028 = vadd.f32 %v964, %v445
          %v1029 = vadd.f32 %v965, %v446
          %v1030 = vadd.f32 %v966, %v447
          %v1031 = vadd.f32 %v967, %v448
          %v1032 = vadd.f32 %v968, %v449
          %v1033 = vadd.f32 %v969, %v450
          %v1034 = vadd.f32 %v970, %v451
          %v1035 = vadd.f32 %v971, %v452
          %v1036 = vadd.f32 %v972, %v453
          %v1037 = vadd.f32 %v973, %v454
          %v1038 = vadd.f32 %v974, %v455
          %v1039 = vadd.f32 %v975, %v456
          %v1040 = vadd.f32 %v976, %v457
          %v1041 = vadd.f32 %v977, %v458
          %v1042 = vadd.f32 %v978, %v459
          %v1043 = vadd.f32 %v979, %v460
          %v1044 = vtanh.pop %v980
          %v1045 = vtanh.pop %v981
          %v1046 = vtanh.pop %v982
          %v1047 = vtanh.pop %v983
          %v1048 = vtanh.pop %v984
          %v1049 = vtanh.pop %v985
          %v1050 = vtanh.pop %v986
          %v1051 = vtanh.pop %v987
          %v1052 = vtanh.pop %v988
          %v1053 = vtanh.pop %v989
          %v1054 = vtanh.pop %v990
          %v1055 = vtanh.pop %v991
          %v1056 = vtanh.pop %v992
          %v1057 = vtanh.pop %v993
          %v1058 = vtanh.pop %v994
          %v1059 = vtanh.pop %v995
          %v1060 = vtanh.pop %v996
          %v1061 = vtanh.pop %v997
          %v1062 = vtanh.pop %v998
          %v1063 = vtanh.pop %v999
          %v1064 = vtanh.pop %v1000
          %v1065 = vtanh.pop %v1001
          %v1066 = vtanh.pop %v1002
          %v1067 = vtanh.pop %v1003
          %v1068 = vtanh.pop %v1004
          %v1069 = vtanh.pop %v1005
          %v1070 = vtanh.pop %v1006
          %v1071 = vtanh.pop %v1007
          %v1072 = vtanh.pop %v1008
          %v1073 = vtanh.pop %v1009
          %v1074 = vtanh.pop %v1010
          %v1075 = vtanh.pop %v1011
          %v1076 = vtanh.pop %v1012
          %v1077 = vtanh.pop %v1013
          %v1078 = vtanh.pop %v1014
          %v1079 = vtanh.pop %v1015
          %v1080 = vtanh.pop %v1016
          %v1081 = vtanh.pop %v1017
          %v1082 = vtanh.pop %v1018
          %v1083 = vtanh.pop %v1019
          %v1084 = vtanh.pop %v1020
          %v1085 = vtanh.pop %v1021
          %v1086 = vtanh.pop %v1022
          %v1087 = vtanh.pop %v1023
          %v1088 = vtanh.pop %v1024
          %v1089 = vtanh.pop %v1025
          %v1090 = vtanh.pop %v1026
          %v1091 = vtanh.pop %v1027
          %v1092 = vtanh.pop %v1028
          %v1093 = vtanh.pop %v1029
          %v1094 = vtanh.pop %v1030
          %v1095 = vtanh.pop %v1031
          %v1096 = vtanh.pop %v1032
          %v1097 = vtanh.pop %v1033
          %v1098 = vtanh.pop %v1034
          %v1099 = vtanh.pop %v1035
          %v1100 = vtanh.pop %v1036
          %v1101 = vtanh.pop %v1037
          %v1102 = vtanh.pop %v1038
          %v1103 = vtanh.pop %v1039
          %v1104 = vtanh.pop %v1040
          %v1105 = vtanh.pop %v1041
          %v1106 = vtanh.pop %v1042
          %v1107 = vtanh.pop %v1043
          %v1108 = vmul.f32 %v1044, %v600
          %v1109 = vmul.f32 %v1045, %v605
          %v1110 = vmul.f32 %v1046, %v610
          %v1111 = vmul.f32 %v1047, %v615
          %v1112 = vmul.f32 %v1048, %v620
          %v1113 = vmul.f32 %v1049, %v625
          %v1114 = vmul.f32 %v1050, %v630
          %v1115 = vmul.f32 %v1051, %v635
          %v1116 = vmul.f32 %v1052, %v600
          %v1117 = vmul.f32 %v1053, %v605
          %v1118 = vmul.f32 %v1054, %v610
          %v1119 = vmul.f32 %v1055, %v615
          %v1120 = vmul.f32 %v1056, %v620
          %v1121 = vmul.f32 %v1057, %v625
          %v1122 = vmul.f32 %v1058, %v630
          %v1123 = vmul.f32 %v1059, %v635
          %v1124 = vmul.f32 %v1060, %v600
          %v1125 = vmul.f32 %v1061, %v605
          %v1126 = vmul.f32 %v1062, %v610
          %v1127 = vmul.f32 %v1063, %v615
          %v1128 = vmul.f32 %v1064, %v620
          %v1129 = vmul.f32 %v1065, %v625
          %v1130 = vmul.f32 %v1066, %v630
          %v1131 = vmul.f32 %v1067, %v635
          %v1132 = vmul.f32 %v1068, %v600
          %v1133 = vmul.f32 %v1069, %v605
          %v1134 = vmul.f32 %v1070, %v610
          %v1135 = vmul.f32 %v1071, %v615
          %v1136 = vmul.f32 %v1072, %v620
          %v1137 = vmul.f32 %v1073, %v625
          %v1138 = vmul.f32 %v1074, %v630
          %v1139 = vmul.f32 %v1075, %v635
          %v1140 = vmul.f32 %v1076, %v600
          %v1141 = vmul.f32 %v1077, %v605
          %v1142 = vmul.f32 %v1078, %v610
          %v1143 = vmul.f32 %v1079, %v615
          %v1144 = vmul.f32 %v1080, %v620
          %v1145 = vmul.f32 %v1081, %v625
          %v1146 = vmul.f32 %v1082, %v630
          %v1147 = vmul.f32 %v1083, %v635
          %v1148 = vmul.f32 %v1084, %v600
          %v1149 = vmul.f32 %v1085, %v605
          %v1150 = vmul.f32 %v1086, %v610
          %v1151 = vmul.f32 %v1087, %v615
          %v1152 = vmul.f32 %v1088, %v620
          %v1153 = vmul.f32 %v1089, %v625
          %v1154 = vmul.f32 %v1090, %v630
          %v1155 = vmul.f32 %v1091, %v635
          %v1156 = vmul.f32 %v1092, %v600
          %v1157 = vmul.f32 %v1093, %v605
          %v1158 = vmul.f32 %v1094, %v610
          %v1159 = vmul.f32 %v1095, %v615
          %v1160 = vmul.f32 %v1096, %v620
          %v1161 = vmul.f32 %v1097, %v625
          %v1162 = vmul.f32 %v1098, %v630
          %v1163 = vmul.f32 %v1099, %v635
          %v1164 = vmul.f32 %v1100, %v600
          %v1165 = vmul.f32 %v1101, %v605
          %v1166 = vmul.f32 %v1102, %v610
          %v1167 = vmul.f32 %v1103, %v615
          %v1168 = vmul.f32 %v1104, %v620
          %v1169 = vmul.f32 %v1105, %v625
          %v1170 = vmul.f32 %v1106, %v630
          %v1171 = vmul.f32 %v1107, %v635
          %v1172 = vadd.f32 %v1108, %v1109
          %v1173 = vadd.f32 %v1172, %v1110
          %v1174 = vadd.f32 %v1173, %v1111
          %v1175 = vadd.f32 %v1174, %v1112
          %v1176 = vadd.f32 %v1175, %v1113
          %v1177 = vadd.f32 %v1176, %v1114
          %v1178 = vadd.f32 %v1177, %v1115
          %v1179 = vrot.slane %v1178, 4
          %v1180 = vadd.f32 %v1178, %v1179
          %v1181 = vrot.slane %v1180, 2
          %v1182 = vadd.f32 %v1180, %v1181
          %v1183 = vrot.slane %v1182, 1
          %v1184 = vadd.f32 %v1182, %v1183
          %v1185 = vadd.f32 %v1116, %v1117
          %v1186 = vadd.f32 %v1185, %v1118
          %v1187 = vadd.f32 %v1186, %v1119
          %v1188 = vadd.f32 %v1187, %v1120
          %v1189 = vadd.f32 %v1188, %v1121
          %v1190 = vadd.f32 %v1189, %v1122
          %v1191 = vadd.f32 %v1190, %v1123
          %v1192 = vrot.slane %v1191, 4
          %v1193 = vadd.f32 %v1191, %v1192
          %v1194 = vrot.slane %v1193, 2
          %v1195 = vadd.f32 %v1193, %v1194
          %v1196 = vrot.slane %v1195, 1
          %v1197 = vadd.f32 %v1195, %v1196
          %v1198 = vadd.f32 %v1124, %v1125
          %v1199 = vadd.f32 %v1198, %v1126
          %v1200 = vadd.f32 %v1199, %v1127
          %v1201 = vadd.f32 %v1200, %v1128
          %v1202 = vadd.f32 %v1201, %v1129
          %v1203 = vadd.f32 %v1202, %v1130
          %v1204 = vadd.f32 %v1203, %v1131
          %v1205 = vrot.slane %v1204, 4
          %v1206 = vadd.f32 %v1204, %v1205
          %v1207 = vrot.slane %v1206, 2
          %v1208 = vadd.f32 %v1206, %v1207
          %v1209 = vrot.slane %v1208, 1
          %v1210 = vadd.f32 %v1208, %v1209
          %v1211 = vadd.f32 %v1132, %v1133
          %v1212 = vadd.f32 %v1211, %v1134
          %v1213 = vadd.f32 %v1212, %v1135
          %v1214 = vadd.f32 %v1213, %v1136
          %v1215 = vadd.f32 %v1214, %v1137
          %v1216 = vadd.f32 %v1215, %v1138
          %v1217 = vadd.f32 %v1216, %v1139
          %v1218 = vrot.slane %v1217, 4
          %v1219 = vadd.f32 %v1217, %v1218
          %v1220 = vrot.slane %v1219, 2
          %v1221 = vadd.f32 %v1219, %v1220
          %v1222 = vrot.slane %v1221, 1
          %v1223 = vadd.f32 %v1221, %v1222
          %v1224 = vadd.f32 %v1140, %v1141
          %v1225 = vadd.f32 %v1224, %v1142
          %v1226 = vadd.f32 %v1225, %v1143
          %v1227 = vadd.f32 %v1226, %v1144
          %v1228 = vadd.f32 %v1227, %v1145
          %v1229 = vadd.f32 %v1228, %v1146
          %v1230 = vadd.f32 %v1229, %v1147
          %v1231 = vrot.slane %v1230, 4
          %v1232 = vadd.f32 %v1230, %v1231
          %v1233 = vrot.slane %v1232, 2
          %v1234 = vadd.f32 %v1232, %v1233
          %v1235 = vrot.slane %v1234, 1
          %v1236 = vadd.f32 %v1234, %v1235
          %v1237 = vadd.f32 %v1148, %v1149
          %v1238 = vadd.f32 %v1237, %v1150
          %v1239 = vadd.f32 %v1238, %v1151
          %v1240 = vadd.f32 %v1239, %v1152
          %v1241 = vadd.f32 %v1240, %v1153
          %v1242 = vadd.f32 %v1241, %v1154
          %v1243 = vadd.f32 %v1242, %v1155
          %v1244 = vrot.slane %v1243, 4
          %v1245 = vadd.f32 %v1243, %v1244
          %v1246 = vrot.slane %v1245, 2
          %v1247 = vadd.f32 %v1245, %v1246
          %v1248 = vrot.slane %v1247, 1
          %v1249 = vadd.f32 %v1247, %v1248
          %v1250 = vadd.f32 %v1156, %v1157
          %v1251 = vadd.f32 %v1250, %v1158
          %v1252 = vadd.f32 %v1251, %v1159
          %v1253 = vadd.f32 %v1252, %v1160
          %v1254 = vadd.f32 %v1253, %v1161
          %v1255 = vadd.f32 %v1254, %v1162
          %v1256 = vadd.f32 %v1255, %v1163
          %v1257 = vrot.slane %v1256, 4
          %v1258 = vadd.f32 %v1256, %v1257
          %v1259 = vrot.slane %v1258, 2
          %v1260 = vadd.f32 %v1258, %v1259
          %v1261 = vrot.slane %v1260, 1
          %v1262 = vadd.f32 %v1260, %v1261
          %v1263 = vadd.f32 %v1164, %v1165
          %v1264 = vadd.f32 %v1263, %v1166
          %v1265 = vadd.f32 %v1264, %v1167
          %v1266 = vadd.f32 %v1265, %v1168
          %v1267 = vadd.f32 %v1266, %v1169
          %v1268 = vadd.f32 %v1267, %v1170
          %v1269 = vadd.f32 %v1268, %v1171
          %v1270 = vrot.slane %v1269, 4
          %v1271 = vadd.f32 %v1269, %v1270
          %v1272 = vrot.slane %v1271, 2
          %v1273 = vadd.f32 %v1271, %v1272
          %v1274 = vrot.slane %v1273, 1
          %v1275 = vadd.f32 %v1273, %v1274
          %v1276 = vadd.f32 %v1184, %v805
          %v1277 = vadd.f32 %v1197, %v805
          %v1278 = vadd.f32 %v1210, %v805
          %v1279 = vadd.f32 %v1223, %v805
          %v1280 = vadd.f32 %v1236, %v805
          %v1281 = vadd.f32 %v1249, %v805
          %v1282 = vadd.f32 %v1262, %v805
          %v1283 = vadd.f32 %v1275, %v805
          %v1292 = vsel %vm822, %v1277, %v1276
          %v1293 = vsel %vm824, %v1278, %v1292
          %v1294 = vsel %vm826, %v1279, %v1293
          %v1295 = vsel %vm828, %v1280, %v1294
          %v1296 = vsel %vm830, %v1281, %v1295
          %v1297 = vsel %vm832, %v1282, %v1296
          %v1298 = vsel %vm834, %v1283, %v1297
          %v1300 = vmul.f32 %v891, %v1298
          %1301 = vadd.xlane.f32.xlu0 %v1300
          %v1302 = vpop.xlane.xlu0 %1301
          %v1304 = vrot.slane %v1302, 1
          %v1305 = vrot.slane %v1302, 2
          %v1306 = vrot.slane %v1302, 3
          %v1307 = vrot.slane %v1302, 4
          %v1308 = vrot.slane %v1302, 5
          %v1309 = vrot.slane %v1302, 6
          %v1310 = vrot.slane %v1302, 7
          %v1319 = vsub.f32 %v1276, %v1302
          %v1320 = vsub.f32 %v1277, %v1304
          %v1321 = vsub.f32 %v1278, %v1305
          %v1322 = vsub.f32 %v1279, %v1306
          %v1323 = vsub.f32 %v1280, %v1307
          %v1324 = vsub.f32 %v1281, %v1308
          %v1325 = vsub.f32 %v1282, %v1309
          %v1326 = vsub.f32 %v1283, %v1310
          %v1335 = vrot.slane %v1320, 7
          %v1336 = vsel %vm822, %v1335, %v1319
          %v1337 = vrot.slane %v1321, 6
          %v1338 = vsel %vm824, %v1337, %v1336
          %v1339 = vrot.slane %v1322, 5
          %v1340 = vsel %vm826, %v1339, %v1338
          %v1341 = vrot.slane %v1323, 4
          %v1342 = vsel %vm828, %v1341, %v1340
          %v1343 = vrot.slane %v1324, 3
          %v1344 = vsel %vm830, %v1343, %v1342
          %v1345 = vrot.slane %v1325, 2
          %v1346 = vsel %vm832, %v1345, %v1344
          %v1347 = vrot.slane %v1326, 1
          %v1348 = vsel %vm834, %v1347, %v1346
          %v1350 = vmul.f32 %v891, %v1348
          %v1351 = vmul.f32 %v889, %v1350
          %v1352 = vadd.f32 %v260, %v1351
          %v1354 = vrot.slane %v1352, 1
          %v1355 = vrot.slane %v1352, 2
          %v1356 = vrot.slane %v1352, 3
          %v1357 = vrot.slane %v1352, 4
          %v1358 = vrot.slane %v1352, 5
          %v1359 = vrot.slane %v1352, 6
          %v1360 = vrot.slane %v1352, 7
          %v1361 = vperm.slane %v1352, 0
          %v1362 = vperm.slane %v1354, 0
          %v1363 = vperm.slane %v1355, 0
          %v1364 = vperm.slane %v1356, 0
          %v1365 = vperm.slane %v1357, 0
          %v1366 = vperm.slane %v1358, 0
          %v1367 = vperm.slane %v1359, 0
          %v1368 = vperm.slane %v1360, 0
          %v1377 = vmul.f32 %v1361, %v296
          %v1378 = vmul.f32 %v1361, %v301
          %v1379 = vmul.f32 %v1361, %v306
          %v1380 = vmul.f32 %v1361, %v311
          %v1381 = vmul.f32 %v1361, %v316
          %v1382 = vmul.f32 %v1361, %v321
          %v1383 = vmul.f32 %v1361, %v326
          %v1384 = vmul.f32 %v1361, %v331
          %v1385 = vmul.f32 %v1362, %v296
          %v1386 = vmul.f32 %v1362, %v301
          %v1387 = vmul.f32 %v1362, %v306
          %v1388 = vmul.f32 %v1362, %v311
          %v1389 = vmul.f32 %v1362, %v316
          %v1390 = vmul.f32 %v1362, %v321
          %v1391 = vmul.f32 %v1362, %v326
          %v1392 = vmul.f32 %v1362, %v331
          %v1393 = vmul.f32 %v1363, %v296
          %v1394 = vmul.f32 %v1363, %v301
          %v1395 = vmul.f32 %v1363, %v306
          %v1396 = vmul.f32 %v1363, %v311
          %v1397 = vmul.f32 %v1363, %v316
          %v1398 = vmul.f32 %v1363, %v321
          %v1399 = vmul.f32 %v1363, %v326
          %v1400 = vmul.f32 %v1363, %v331
          %v1401 = vmul.f32 %v1364, %v296
          %v1402 = vmul.f32 %v1364, %v301
          %v1403 = vmul.f32 %v1364, %v306
          %v1404 = vmul.f32 %v1364, %v311
          %v1405 = vmul.f32 %v1364, %v316
          %v1406 = vmul.f32 %v1364, %v321
          %v1407 = vmul.f32 %v1364, %v326
          %v1408 = vmul.f32 %v1364, %v331
          %v1409 = vmul.f32 %v1365, %v296
          %v1410 = vmul.f32 %v1365, %v301
          %v1411 = vmul.f32 %v1365, %v306
          %v1412 = vmul.f32 %v1365, %v311
          %v1413 = vmul.f32 %v1365, %v316
          %v1414 = vmul.f32 %v1365, %v321
          %v1415 = vmul.f32 %v1365, %v326
          %v1416 = vmul.f32 %v1365, %v331
          %v1417 = vmul.f32 %v1366, %v296
          %v1418 = vmul.f32 %v1366, %v301
          %v1419 = vmul.f32 %v1366, %v306
          %v1420 = vmul.f32 %v1366, %v311
          %v1421 = vmul.f32 %v1366, %v316
          %v1422 = vmul.f32 %v1366, %v321
          %v1423 = vmul.f32 %v1366, %v326
          %v1424 = vmul.f32 %v1366, %v331
          %v1425 = vmul.f32 %v1367, %v296
          %v1426 = vmul.f32 %v1367, %v301
          %v1427 = vmul.f32 %v1367, %v306
          %v1428 = vmul.f32 %v1367, %v311
          %v1429 = vmul.f32 %v1367, %v316
          %v1430 = vmul.f32 %v1367, %v321
          %v1431 = vmul.f32 %v1367, %v326
          %v1432 = vmul.f32 %v1367, %v331
          %v1433 = vmul.f32 %v1368, %v296
          %v1434 = vmul.f32 %v1368, %v301
          %v1435 = vmul.f32 %v1368, %v306
          %v1436 = vmul.f32 %v1368, %v311
          %v1437 = vmul.f32 %v1368, %v316
          %v1438 = vmul.f32 %v1368, %v321
          %v1439 = vmul.f32 %v1368, %v326
          %v1440 = vmul.f32 %v1368, %v331
          %v1441 = vadd.f32 %v1377, %v397
          %v1442 = vadd.f32 %v1378, %v398
          %v1443 = vadd.f32 %v1379, %v399
          %v1444 = vadd.f32 %v1380, %v400
          %v1445 = vadd.f32 %v1381, %v401
          %v1446 = vadd.f32 %v1382, %v402
          %v1447 = vadd.f32 %v1383, %v403
          %v1448 = vadd.f32 %v1384, %v404
          %v1449 = vadd.f32 %v1385, %v405
          %v1450 = vadd.f32 %v1386, %v406
          %v1451 = vadd.f32 %v1387, %v407
          %v1452 = vadd.f32 %v1388, %v408
          %v1453 = vadd.f32 %v1389, %v409
          %v1454 = vadd.f32 %v1390, %v410
          %v1455 = vadd.f32 %v1391, %v411
          %v1456 = vadd.f32 %v1392, %v412
          %v1457 = vadd.f32 %v1393, %v413
          %v1458 = vadd.f32 %v1394, %v414
          %v1459 = vadd.f32 %v1395, %v415
          %v1460 = vadd.f32 %v1396, %v416
          %v1461 = vadd.f32 %v1397, %v417
          %v1462 = vadd.f32 %v1398, %v418
          %v1463 = vadd.f32 %v1399, %v419
          %v1464 = vadd.f32 %v1400, %v420
          %v1465 = vadd.f32 %v1401, %v421
          %v1466 = vadd.f32 %v1402, %v422
          %v1467 = vadd.f32 %v1403, %v423
          %v1468 = vadd.f32 %v1404, %v424
          %v1469 = vadd.f32 %v1405, %v425
          %v1470 = vadd.f32 %v1406, %v426
          %v1471 = vadd.f32 %v1407, %v427
          %v1472 = vadd.f32 %v1408, %v428
          %v1473 = vadd.f32 %v1409, %v429
          %v1474 = vadd.f32 %v1410, %v430
          %v1475 = vadd.f32 %v1411, %v431
          %v1476 = vadd.f32 %v1412, %v432
          %v1477 = vadd.f32 %v1413, %v433
          %v1478 = vadd.f32 %v1414, %v434
          %v1479 = vadd.f32 %v1415, %v435
          %v1480 = vadd.f32 %v1416, %v436
          %v1481 = vadd.f32 %v1417, %v437
          %v1482 = vadd.f32 %v1418, %v438
          %v1483 = vadd.f32 %v1419, %v439
          %v1484 = vadd.f32 %v1420, %v440
          %v1485 = vadd.f32 %v1421, %v441
          %v1486 = vadd.f32 %v1422, %v442
          %v1487 = vadd.f32 %v1423, %v443
          %v1488 = vadd.f32 %v1424, %v444
          %v1489 = vadd.f32 %v1425, %v445
          %v1490 = vadd.f32 %v1426, %v446
          %v1491 = vadd.f32 %v1427, %v447
          %v1492 = vadd.f32 %v1428, %v448
          %v1493 = vadd.f32 %v1429, %v449
          %v1494 = vadd.f32 %v1430, %v450
          %v1495 = vadd.f32 %v1431, %v451
          %v1496 = vadd.f32 %v1432, %v452
          %v1497 = vadd.f32 %v1433, %v453
          %v1498 = vadd.f32 %v1434, %v454
          %v1499 = vadd.f32 %v1435, %v455
          %v1500 = vadd.f32 %v1436, %v456
          %v1501 = vadd.f32 %v1437, %v457
          %v1502 = vadd.f32 %v1438, %v458
          %v1503 = vadd.f32 %v1439, %v459
          %v1504 = vadd.f32 %v1440, %v460
          %v1505 = vtanh.pop %v1441
          %v1506 = vtanh.pop %v1442
          %v1507 = vtanh.pop %v1443
          %v1508 = vtanh.pop %v1444
          %v1509 = vtanh.pop %v1445
          %v1510 = vtanh.pop %v1446
          %v1511 = vtanh.pop %v1447
          %v1512 = vtanh.pop %v1448
          %v1513 = vtanh.pop %v1449
          %v1514 = vtanh.pop %v1450
          %v1515 = vtanh.pop %v1451
          %v1516 = vtanh.pop %v1452
          %v1517 = vtanh.pop %v1453
          %v1518 = vtanh.pop %v1454
          %v1519 = vtanh.pop %v1455
          %v1520 = vtanh.pop %v1456
          %v1521 = vtanh.pop %v1457
          %v1522 = vtanh.pop %v1458
          %v1523 = vtanh.pop %v1459
          %v1524 = vtanh.pop %v1460
          %v1525 = vtanh.pop %v1461
          %v1526 = vtanh.pop %v1462
          %v1527 = vtanh.pop %v1463
          %v1528 = vtanh.pop %v1464
          %v1529 = vtanh.pop %v1465
          %v1530 = vtanh.pop %v1466
          %v1531 = vtanh.pop %v1467
          %v1532 = vtanh.pop %v1468
          %v1533 = vtanh.pop %v1469
          %v1534 = vtanh.pop %v1470
          %v1535 = vtanh.pop %v1471
          %v1536 = vtanh.pop %v1472
          %v1537 = vtanh.pop %v1473
          %v1538 = vtanh.pop %v1474
          %v1539 = vtanh.pop %v1475
          %v1540 = vtanh.pop %v1476
          %v1541 = vtanh.pop %v1477
          %v1542 = vtanh.pop %v1478
          %v1543 = vtanh.pop %v1479
          %v1544 = vtanh.pop %v1480
          %v1545 = vtanh.pop %v1481
          %v1546 = vtanh.pop %v1482
          %v1547 = vtanh.pop %v1483
          %v1548 = vtanh.pop %v1484
          %v1549 = vtanh.pop %v1485
          %v1550 = vtanh.pop %v1486
          %v1551 = vtanh.pop %v1487
          %v1552 = vtanh.pop %v1488
          %v1553 = vtanh.pop %v1489
          %v1554 = vtanh.pop %v1490
          %v1555 = vtanh.pop %v1491
          %v1556 = vtanh.pop %v1492
          %v1557 = vtanh.pop %v1493
          %v1558 = vtanh.pop %v1494
          %v1559 = vtanh.pop %v1495
          %v1560 = vtanh.pop %v1496
          %v1561 = vtanh.pop %v1497
          %v1562 = vtanh.pop %v1498
          %v1563 = vtanh.pop %v1499
          %v1564 = vtanh.pop %v1500
          %v1565 = vtanh.pop %v1501
          %v1566 = vtanh.pop %v1502
          %v1567 = vtanh.pop %v1503
          %v1568 = vtanh.pop %v1504
          %v1569 = vmul.f32 %v1505, %v600
          %v1570 = vmul.f32 %v1506, %v605
          %v1571 = vmul.f32 %v1507, %v610
          %v1572 = vmul.f32 %v1508, %v615
          %v1573 = vmul.f32 %v1509, %v620
          %v1574 = vmul.f32 %v1510, %v625
          %v1575 = vmul.f32 %v1511, %v630
          %v1576 = vmul.f32 %v1512, %v635
          %v1577 = vmul.f32 %v1513, %v600
          %v1578 = vmul.f32 %v1514, %v605
          %v1579 = vmul.f32 %v1515, %v610
          %v1580 = vmul.f32 %v1516, %v615
          %v1581 = vmul.f32 %v1517, %v620
          %v1582 = vmul.f32 %v1518, %v625
          %v1583 = vmul.f32 %v1519, %v630
          %v1584 = vmul.f32 %v1520, %v635
          %v1585 = vmul.f32 %v1521, %v600
          %v1586 = vmul.f32 %v1522, %v605
          %v1587 = vmul.f32 %v1523, %v610
          %v1588 = vmul.f32 %v1524, %v615
          %v1589 = vmul.f32 %v1525, %v620
          %v1590 = vmul.f32 %v1526, %v625
          %v1591 = vmul.f32 %v1527, %v630
          %v1592 = vmul.f32 %v1528, %v635
          %v1593 = vmul.f32 %v1529, %v600
          %v1594 = vmul.f32 %v1530, %v605
          %v1595 = vmul.f32 %v1531, %v610
          %v1596 = vmul.f32 %v1532, %v615
          %v1597 = vmul.f32 %v1533, %v620
          %v1598 = vmul.f32 %v1534, %v625
          %v1599 = vmul.f32 %v1535, %v630
          %v1600 = vmul.f32 %v1536, %v635
          %v1601 = vmul.f32 %v1537, %v600
          %v1602 = vmul.f32 %v1538, %v605
          %v1603 = vmul.f32 %v1539, %v610
          %v1604 = vmul.f32 %v1540, %v615
          %v1605 = vmul.f32 %v1541, %v620
          %v1606 = vmul.f32 %v1542, %v625
          %v1607 = vmul.f32 %v1543, %v630
          %v1608 = vmul.f32 %v1544, %v635
          %v1609 = vmul.f32 %v1545, %v600
          %v1610 = vmul.f32 %v1546, %v605
          %v1611 = vmul.f32 %v1547, %v610
          %v1612 = vmul.f32 %v1548, %v615
          %v1613 = vmul.f32 %v1549, %v620
          %v1614 = vmul.f32 %v1550, %v625
          %v1615 = vmul.f32 %v1551, %v630
          %v1616 = vmul.f32 %v1552, %v635
          %v1617 = vmul.f32 %v1553, %v600
          %v1618 = vmul.f32 %v1554, %v605
          %v1619 = vmul.f32 %v1555, %v610
          %v1620 = vmul.f32 %v1556, %v615
          %v1621 = vmul.f32 %v1557, %v620
          %v1622 = vmul.f32 %v1558, %v625
          %v1623 = vmul.f32 %v1559, %v630
          %v1624 = vmul.f32 %v1560, %v635
          %v1625 = vmul.f32 %v1561, %v600
          %v1626 = vmul.f32 %v1562, %v605
          %v1627 = vmul.f32 %v1563, %v610
          %v1628 = vmul.f32 %v1564, %v615
          %v1629 = vmul.f32 %v1565, %v620
          %v1630 = vmul.f32 %v1566, %v625
          %v1631 = vmul.f32 %v1567, %v630
          %v1632 = vmul.f32 %v1568, %v635
          %v1633 = vadd.f32 %v1569, %v1570
          %v1634 = vadd.f32 %v1633, %v1571
          %v1635 = vadd.f32 %v1634, %v1572
          %v1636 = vadd.f32 %v1635, %v1573
          %v1637 = vadd.f32 %v1636, %v1574
          %v1638 = vadd.f32 %v1637, %v1575
          %v1639 = vadd.f32 %v1638, %v1576
          %v1640 = vrot.slane %v1639, 4
          %v1641 = vadd.f32 %v1639, %v1640
          %v1642 = vrot.slane %v1641, 2
          %v1643 = vadd.f32 %v1641, %v1642
          %v1644 = vrot.slane %v1643, 1
          %v1645 = vadd.f32 %v1643, %v1644
          %v1646 = vadd.f32 %v1577, %v1578
          %v1647 = vadd.f32 %v1646, %v1579
          %v1648 = vadd.f32 %v1647, %v1580
          %v1649 = vadd.f32 %v1648, %v1581
          %v1650 = vadd.f32 %v1649, %v1582
          %v1651 = vadd.f32 %v1650, %v1583
          %v1652 = vadd.f32 %v1651, %v1584
          %v1653 = vrot.slane %v1652, 4
          %v1654 = vadd.f32 %v1652, %v1653
          %v1655 = vrot.slane %v1654, 2
          %v1656 = vadd.f32 %v1654, %v1655
          %v1657 = vrot.slane %v1656, 1
          %v1658 = vadd.f32 %v1656, %v1657
          %v1659 = vadd.f32 %v1585, %v1586
          %v1660 = vadd.f32 %v1659, %v1587
          %v1661 = vadd.f32 %v1660, %v1588
          %v1662 = vadd.f32 %v1661, %v1589
          %v1663 = vadd.f32 %v1662, %v1590
          %v1664 = vadd.f32 %v1663, %v1591
          %v1665 = vadd.f32 %v1664, %v1592
          %v1666 = vrot.slane %v1665, 4
          %v1667 = vadd.f32 %v1665, %v1666
          %v1668 = vrot.slane %v1667, 2
          %v1669 = vadd.f32 %v1667, %v1668
          %v1670 = vrot.slane %v1669, 1
          %v1671 = vadd.f32 %v1669, %v1670
          %v1672 = vadd.f32 %v1593, %v1594
          %v1673 = vadd.f32 %v1672, %v1595
          %v1674 = vadd.f32 %v1673, %v1596
          %v1675 = vadd.f32 %v1674, %v1597
          %v1676 = vadd.f32 %v1675, %v1598
          %v1677 = vadd.f32 %v1676, %v1599
          %v1678 = vadd.f32 %v1677, %v1600
          %v1679 = vrot.slane %v1678, 4
          %v1680 = vadd.f32 %v1678, %v1679
          %v1681 = vrot.slane %v1680, 2
          %v1682 = vadd.f32 %v1680, %v1681
          %v1683 = vrot.slane %v1682, 1
          %v1684 = vadd.f32 %v1682, %v1683
          %v1685 = vadd.f32 %v1601, %v1602
          %v1686 = vadd.f32 %v1685, %v1603
          %v1687 = vadd.f32 %v1686, %v1604
          %v1688 = vadd.f32 %v1687, %v1605
          %v1689 = vadd.f32 %v1688, %v1606
          %v1690 = vadd.f32 %v1689, %v1607
          %v1691 = vadd.f32 %v1690, %v1608
          %v1692 = vrot.slane %v1691, 4
          %v1693 = vadd.f32 %v1691, %v1692
          %v1694 = vrot.slane %v1693, 2
          %v1695 = vadd.f32 %v1693, %v1694
          %v1696 = vrot.slane %v1695, 1
          %v1697 = vadd.f32 %v1695, %v1696
          %v1698 = vadd.f32 %v1609, %v1610
          %v1699 = vadd.f32 %v1698, %v1611
          %v1700 = vadd.f32 %v1699, %v1612
          %v1701 = vadd.f32 %v1700, %v1613
          %v1702 = vadd.f32 %v1701, %v1614
          %v1703 = vadd.f32 %v1702, %v1615
          %v1704 = vadd.f32 %v1703, %v1616
          %v1705 = vrot.slane %v1704, 4
          %v1706 = vadd.f32 %v1704, %v1705
          %v1707 = vrot.slane %v1706, 2
          %v1708 = vadd.f32 %v1706, %v1707
          %v1709 = vrot.slane %v1708, 1
          %v1710 = vadd.f32 %v1708, %v1709
          %v1711 = vadd.f32 %v1617, %v1618
          %v1712 = vadd.f32 %v1711, %v1619
          %v1713 = vadd.f32 %v1712, %v1620
          %v1714 = vadd.f32 %v1713, %v1621
          %v1715 = vadd.f32 %v1714, %v1622
          %v1716 = vadd.f32 %v1715, %v1623
          %v1717 = vadd.f32 %v1716, %v1624
          %v1718 = vrot.slane %v1717, 4
          %v1719 = vadd.f32 %v1717, %v1718
          %v1720 = vrot.slane %v1719, 2
          %v1721 = vadd.f32 %v1719, %v1720
          %v1722 = vrot.slane %v1721, 1
          %v1723 = vadd.f32 %v1721, %v1722
          %v1724 = vadd.f32 %v1625, %v1626
          %v1725 = vadd.f32 %v1724, %v1627
          %v1726 = vadd.f32 %v1725, %v1628
          %v1727 = vadd.f32 %v1726, %v1629
          %v1728 = vadd.f32 %v1727, %v1630
          %v1729 = vadd.f32 %v1728, %v1631
          %v1730 = vadd.f32 %v1729, %v1632
          %v1731 = vrot.slane %v1730, 4
          %v1732 = vadd.f32 %v1730, %v1731
          %v1733 = vrot.slane %v1732, 2
          %v1734 = vadd.f32 %v1732, %v1733
          %v1735 = vrot.slane %v1734, 1
          %v1736 = vadd.f32 %v1734, %v1735
          %v1737 = vadd.f32 %v1645, %v805
          %v1738 = vadd.f32 %v1658, %v805
          %v1739 = vadd.f32 %v1671, %v805
          %v1740 = vadd.f32 %v1684, %v805
          %v1741 = vadd.f32 %v1697, %v805
          %v1742 = vadd.f32 %v1710, %v805
          %v1743 = vadd.f32 %v1723, %v805
          %v1744 = vadd.f32 %v1736, %v805
          %v1753 = vsel %vm822, %v1738, %v1737
          %v1754 = vsel %vm824, %v1739, %v1753
          %v1755 = vsel %vm826, %v1740, %v1754
          %v1756 = vsel %vm828, %v1741, %v1755
          %v1757 = vsel %vm830, %v1742, %v1756
          %v1758 = vsel %vm832, %v1743, %v1757
          %v1759 = vsel %vm834, %v1744, %v1758
          %v1761 = vmul.f32 %v1352, %v1759
          %1762 = vadd.xlane.f32.xlu0 %v1761
          %v1763 = vpop.xlane.xlu0 %1762
          %v1765 = vrot.slane %v1763, 1
          %v1766 = vrot.slane %v1763, 2
          %v1767 = vrot.slane %v1763, 3
          %v1768 = vrot.slane %v1763, 4
          %v1769 = vrot.slane %v1763, 5
          %v1770 = vrot.slane %v1763, 6
          %v1771 = vrot.slane %v1763, 7
          %v1780 = vsub.f32 %v1737, %v1763
          %v1781 = vsub.f32 %v1738, %v1765
          %v1782 = vsub.f32 %v1739, %v1766
          %v1783 = vsub.f32 %v1740, %v1767
          %v1784 = vsub.f32 %v1741, %v1768
          %v1785 = vsub.f32 %v1742, %v1769
          %v1786 = vsub.f32 %v1743, %v1770
          %v1787 = vsub.f32 %v1744, %v1771
          %v1796 = vrot.slane %v1781, 7
          %v1797 = vsel %vm822, %v1796, %v1780
          %v1798 = vrot.slane %v1782, 6
          %v1799 = vsel %vm824, %v1798, %v1797
          %v1800 = vrot.slane %v1783, 5
          %v1801 = vsel %vm826, %v1800, %v1799
          %v1802 = vrot.slane %v1784, 4
          %v1803 = vsel %vm828, %v1802, %v1801
          %v1804 = vrot.slane %v1785, 3
          %v1805 = vsel %vm830, %v1804, %v1803
          %v1806 = vrot.slane %v1786, 2
          %v1807 = vsel %vm832, %v1806, %v1805
          %v1808 = vrot.slane %v1787, 1
          %v1809 = vsel %vm834, %v1808, %v1807
          %v1811 = vmul.f32 %v1352, %v1809
          %v1812 = vstv %s258
          %v1813 = vmul.f32 %v1812, %v1811
          %v1814 = vadd.f32 %v260, %v1813
          %v1816 = vrot.slane %v1814, 1
          %v1817 = vrot.slane %v1814, 2
          %v1818 = vrot.slane %v1814, 3
          %v1819 = vrot.slane %v1814, 4
          %v1820 = vrot.slane %v1814, 5
          %v1821 = vrot.slane %v1814, 6
          %v1822 = vrot.slane %v1814, 7
          %v1823 = vperm.slane %v1814, 0
          %v1824 = vperm.slane %v1816, 0
          %v1825 = vperm.slane %v1817, 0
          %v1826 = vperm.slane %v1818, 0
          %v1827 = vperm.slane %v1819, 0
          %v1828 = vperm.slane %v1820, 0
          %v1829 = vperm.slane %v1821, 0
          %v1830 = vperm.slane %v1822, 0
          %v1839 = vmul.f32 %v1823, %v296
          %v1840 = vmul.f32 %v1823, %v301
          %v1841 = vmul.f32 %v1823, %v306
          %v1842 = vmul.f32 %v1823, %v311
          %v1843 = vmul.f32 %v1823, %v316
          %v1844 = vmul.f32 %v1823, %v321
          %v1845 = vmul.f32 %v1823, %v326
          %v1846 = vmul.f32 %v1823, %v331
          %v1847 = vmul.f32 %v1824, %v296
          %v1848 = vmul.f32 %v1824, %v301
          %v1849 = vmul.f32 %v1824, %v306
          %v1850 = vmul.f32 %v1824, %v311
          %v1851 = vmul.f32 %v1824, %v316
          %v1852 = vmul.f32 %v1824, %v321
          %v1853 = vmul.f32 %v1824, %v326
          %v1854 = vmul.f32 %v1824, %v331
          %v1855 = vmul.f32 %v1825, %v296
          %v1856 = vmul.f32 %v1825, %v301
          %v1857 = vmul.f32 %v1825, %v306
          %v1858 = vmul.f32 %v1825, %v311
          %v1859 = vmul.f32 %v1825, %v316
          %v1860 = vmul.f32 %v1825, %v321
          %v1861 = vmul.f32 %v1825, %v326
          %v1862 = vmul.f32 %v1825, %v331
          %v1863 = vmul.f32 %v1826, %v296
          %v1864 = vmul.f32 %v1826, %v301
          %v1865 = vmul.f32 %v1826, %v306
          %v1866 = vmul.f32 %v1826, %v311
          %v1867 = vmul.f32 %v1826, %v316
          %v1868 = vmul.f32 %v1826, %v321
          %v1869 = vmul.f32 %v1826, %v326
          %v1870 = vmul.f32 %v1826, %v331
          %v1871 = vmul.f32 %v1827, %v296
          %v1872 = vmul.f32 %v1827, %v301
          %v1873 = vmul.f32 %v1827, %v306
          %v1874 = vmul.f32 %v1827, %v311
          %v1875 = vmul.f32 %v1827, %v316
          %v1876 = vmul.f32 %v1827, %v321
          %v1877 = vmul.f32 %v1827, %v326
          %v1878 = vmul.f32 %v1827, %v331
          %v1879 = vmul.f32 %v1828, %v296
          %v1880 = vmul.f32 %v1828, %v301
          %v1881 = vmul.f32 %v1828, %v306
          %v1882 = vmul.f32 %v1828, %v311
          %v1883 = vmul.f32 %v1828, %v316
          %v1884 = vmul.f32 %v1828, %v321
          %v1885 = vmul.f32 %v1828, %v326
          %v1886 = vmul.f32 %v1828, %v331
          %v1887 = vmul.f32 %v1829, %v296
          %v1888 = vmul.f32 %v1829, %v301
          %v1889 = vmul.f32 %v1829, %v306
          %v1890 = vmul.f32 %v1829, %v311
          %v1891 = vmul.f32 %v1829, %v316
          %v1892 = vmul.f32 %v1829, %v321
          %v1893 = vmul.f32 %v1829, %v326
          %v1894 = vmul.f32 %v1829, %v331
          %v1895 = vmul.f32 %v1830, %v296
          %v1896 = vmul.f32 %v1830, %v301
          %v1897 = vmul.f32 %v1830, %v306
          %v1898 = vmul.f32 %v1830, %v311
          %v1899 = vmul.f32 %v1830, %v316
          %v1900 = vmul.f32 %v1830, %v321
          %v1901 = vmul.f32 %v1830, %v326
          %v1902 = vmul.f32 %v1830, %v331
          %v1903 = vadd.f32 %v1839, %v397
          %v1904 = vadd.f32 %v1840, %v398
          %v1905 = vadd.f32 %v1841, %v399
          %v1906 = vadd.f32 %v1842, %v400
          %v1907 = vadd.f32 %v1843, %v401
          %v1908 = vadd.f32 %v1844, %v402
          %v1909 = vadd.f32 %v1845, %v403
          %v1910 = vadd.f32 %v1846, %v404
          %v1911 = vadd.f32 %v1847, %v405
          %v1912 = vadd.f32 %v1848, %v406
          %v1913 = vadd.f32 %v1849, %v407
          %v1914 = vadd.f32 %v1850, %v408
          %v1915 = vadd.f32 %v1851, %v409
          %v1916 = vadd.f32 %v1852, %v410
          %v1917 = vadd.f32 %v1853, %v411
          %v1918 = vadd.f32 %v1854, %v412
          %v1919 = vadd.f32 %v1855, %v413
          %v1920 = vadd.f32 %v1856, %v414
          %v1921 = vadd.f32 %v1857, %v415
          %v1922 = vadd.f32 %v1858, %v416
          %v1923 = vadd.f32 %v1859, %v417
          %v1924 = vadd.f32 %v1860, %v418
          %v1925 = vadd.f32 %v1861, %v419
          %v1926 = vadd.f32 %v1862, %v420
          %v1927 = vadd.f32 %v1863, %v421
          %v1928 = vadd.f32 %v1864, %v422
          %v1929 = vadd.f32 %v1865, %v423
          %v1930 = vadd.f32 %v1866, %v424
          %v1931 = vadd.f32 %v1867, %v425
          %v1932 = vadd.f32 %v1868, %v426
          %v1933 = vadd.f32 %v1869, %v427
          %v1934 = vadd.f32 %v1870, %v428
          %v1935 = vadd.f32 %v1871, %v429
          %v1936 = vadd.f32 %v1872, %v430
          %v1937 = vadd.f32 %v1873, %v431
          %v1938 = vadd.f32 %v1874, %v432
          %v1939 = vadd.f32 %v1875, %v433
          %v1940 = vadd.f32 %v1876, %v434
          %v1941 = vadd.f32 %v1877, %v435
          %v1942 = vadd.f32 %v1878, %v436
          %v1943 = vadd.f32 %v1879, %v437
          %v1944 = vadd.f32 %v1880, %v438
          %v1945 = vadd.f32 %v1881, %v439
          %v1946 = vadd.f32 %v1882, %v440
          %v1947 = vadd.f32 %v1883, %v441
          %v1948 = vadd.f32 %v1884, %v442
          %v1949 = vadd.f32 %v1885, %v443
          %v1950 = vadd.f32 %v1886, %v444
          %v1951 = vadd.f32 %v1887, %v445
          %v1952 = vadd.f32 %v1888, %v446
          %v1953 = vadd.f32 %v1889, %v447
          %v1954 = vadd.f32 %v1890, %v448
          %v1955 = vadd.f32 %v1891, %v449
          %v1956 = vadd.f32 %v1892, %v450
          %v1957 = vadd.f32 %v1893, %v451
          %v1958 = vadd.f32 %v1894, %v452
          %v1959 = vadd.f32 %v1895, %v453
          %v1960 = vadd.f32 %v1896, %v454
          %v1961 = vadd.f32 %v1897, %v455
          %v1962 = vadd.f32 %v1898, %v456
          %v1963 = vadd.f32 %v1899, %v457
          %v1964 = vadd.f32 %v1900, %v458
          %v1965 = vadd.f32 %v1901, %v459
          %v1966 = vadd.f32 %v1902, %v460
          %v1967 = vtanh.pop %v1903
          %v1968 = vtanh.pop %v1904
          %v1969 = vtanh.pop %v1905
          %v1970 = vtanh.pop %v1906
          %v1971 = vtanh.pop %v1907
          %v1972 = vtanh.pop %v1908
          %v1973 = vtanh.pop %v1909
          %v1974 = vtanh.pop %v1910
          %v1975 = vtanh.pop %v1911
          %v1976 = vtanh.pop %v1912
          %v1977 = vtanh.pop %v1913
          %v1978 = vtanh.pop %v1914
          %v1979 = vtanh.pop %v1915
          %v1980 = vtanh.pop %v1916
          %v1981 = vtanh.pop %v1917
          %v1982 = vtanh.pop %v1918
          %v1983 = vtanh.pop %v1919
          %v1984 = vtanh.pop %v1920
          %v1985 = vtanh.pop %v1921
          %v1986 = vtanh.pop %v1922
          %v1987 = vtanh.pop %v1923
          %v1988 = vtanh.pop %v1924
          %v1989 = vtanh.pop %v1925
          %v1990 = vtanh.pop %v1926
          %v1991 = vtanh.pop %v1927
          %v1992 = vtanh.pop %v1928
          %v1993 = vtanh.pop %v1929
          %v1994 = vtanh.pop %v1930
          %v1995 = vtanh.pop %v1931
          %v1996 = vtanh.pop %v1932
          %v1997 = vtanh.pop %v1933
          %v1998 = vtanh.pop %v1934
          %v1999 = vtanh.pop %v1935
          %v2000 = vtanh.pop %v1936
          %v2001 = vtanh.pop %v1937
          %v2002 = vtanh.pop %v1938
          %v2003 = vtanh.pop %v1939
          %v2004 = vtanh.pop %v1940
          %v2005 = vtanh.pop %v1941
          %v2006 = vtanh.pop %v1942
          %v2007 = vtanh.pop %v1943
          %v2008 = vtanh.pop %v1944
          %v2009 = vtanh.pop %v1945
          %v2010 = vtanh.pop %v1946
          %v2011 = vtanh.pop %v1947
          %v2012 = vtanh.pop %v1948
          %v2013 = vtanh.pop %v1949
          %v2014 = vtanh.pop %v1950
          %v2015 = vtanh.pop %v1951
          %v2016 = vtanh.pop %v1952
          %v2017 = vtanh.pop %v1953
          %v2018 = vtanh.pop %v1954
          %v2019 = vtanh.pop %v1955
          %v2020 = vtanh.pop %v1956
          %v2021 = vtanh.pop %v1957
          %v2022 = vtanh.pop %v1958
          %v2023 = vtanh.pop %v1959
          %v2024 = vtanh.pop %v1960
          %v2025 = vtanh.pop %v1961
          %v2026 = vtanh.pop %v1962
          %v2027 = vtanh.pop %v1963
          %v2028 = vtanh.pop %v1964
          %v2029 = vtanh.pop %v1965
          %v2030 = vtanh.pop %v1966
          %v2031 = vmul.f32 %v1967, %v600
          %v2032 = vmul.f32 %v1968, %v605
          %v2033 = vmul.f32 %v1969, %v610
          %v2034 = vmul.f32 %v1970, %v615
          %v2035 = vmul.f32 %v1971, %v620
          %v2036 = vmul.f32 %v1972, %v625
          %v2037 = vmul.f32 %v1973, %v630
          %v2038 = vmul.f32 %v1974, %v635
          %v2039 = vmul.f32 %v1975, %v600
          %v2040 = vmul.f32 %v1976, %v605
          %v2041 = vmul.f32 %v1977, %v610
          %v2042 = vmul.f32 %v1978, %v615
          %v2043 = vmul.f32 %v1979, %v620
          %v2044 = vmul.f32 %v1980, %v625
          %v2045 = vmul.f32 %v1981, %v630
          %v2046 = vmul.f32 %v1982, %v635
          %v2047 = vmul.f32 %v1983, %v600
          %v2048 = vmul.f32 %v1984, %v605
          %v2049 = vmul.f32 %v1985, %v610
          %v2050 = vmul.f32 %v1986, %v615
          %v2051 = vmul.f32 %v1987, %v620
          %v2052 = vmul.f32 %v1988, %v625
          %v2053 = vmul.f32 %v1989, %v630
          %v2054 = vmul.f32 %v1990, %v635
          %v2055 = vmul.f32 %v1991, %v600
          %v2056 = vmul.f32 %v1992, %v605
          %v2057 = vmul.f32 %v1993, %v610
          %v2058 = vmul.f32 %v1994, %v615
          %v2059 = vmul.f32 %v1995, %v620
          %v2060 = vmul.f32 %v1996, %v625
          %v2061 = vmul.f32 %v1997, %v630
          %v2062 = vmul.f32 %v1998, %v635
          %v2063 = vmul.f32 %v1999, %v600
          %v2064 = vmul.f32 %v2000, %v605
          %v2065 = vmul.f32 %v2001, %v610
          %v2066 = vmul.f32 %v2002, %v615
          %v2067 = vmul.f32 %v2003, %v620
          %v2068 = vmul.f32 %v2004, %v625
          %v2069 = vmul.f32 %v2005, %v630
          %v2070 = vmul.f32 %v2006, %v635
          %v2071 = vmul.f32 %v2007, %v600
          %v2072 = vmul.f32 %v2008, %v605
          %v2073 = vmul.f32 %v2009, %v610
          %v2074 = vmul.f32 %v2010, %v615
          %v2075 = vmul.f32 %v2011, %v620
          %v2076 = vmul.f32 %v2012, %v625
          %v2077 = vmul.f32 %v2013, %v630
          %v2078 = vmul.f32 %v2014, %v635
          %v2079 = vmul.f32 %v2015, %v600
          %v2080 = vmul.f32 %v2016, %v605
          %v2081 = vmul.f32 %v2017, %v610
          %v2082 = vmul.f32 %v2018, %v615
          %v2083 = vmul.f32 %v2019, %v620
          %v2084 = vmul.f32 %v2020, %v625
          %v2085 = vmul.f32 %v2021, %v630
          %v2086 = vmul.f32 %v2022, %v635
          %v2087 = vmul.f32 %v2023, %v600
          %v2088 = vmul.f32 %v2024, %v605
          %v2089 = vmul.f32 %v2025, %v610
          %v2090 = vmul.f32 %v2026, %v615
          %v2091 = vmul.f32 %v2027, %v620
          %v2092 = vmul.f32 %v2028, %v625
          %v2093 = vmul.f32 %v2029, %v630
          %v2094 = vmul.f32 %v2030, %v635
          %v2095 = vadd.f32 %v2031, %v2032
          %v2096 = vadd.f32 %v2095, %v2033
          %v2097 = vadd.f32 %v2096, %v2034
          %v2098 = vadd.f32 %v2097, %v2035
          %v2099 = vadd.f32 %v2098, %v2036
          %v2100 = vadd.f32 %v2099, %v2037
          %v2101 = vadd.f32 %v2100, %v2038
          %v2102 = vrot.slane %v2101, 4
          %v2103 = vadd.f32 %v2101, %v2102
          %v2104 = vrot.slane %v2103, 2
          %v2105 = vadd.f32 %v2103, %v2104
          %v2106 = vrot.slane %v2105, 1
          %v2107 = vadd.f32 %v2105, %v2106
          %v2108 = vadd.f32 %v2039, %v2040
          %v2109 = vadd.f32 %v2108, %v2041
          %v2110 = vadd.f32 %v2109, %v2042
          %v2111 = vadd.f32 %v2110, %v2043
          %v2112 = vadd.f32 %v2111, %v2044
          %v2113 = vadd.f32 %v2112, %v2045
          %v2114 = vadd.f32 %v2113, %v2046
          %v2115 = vrot.slane %v2114, 4
          %v2116 = vadd.f32 %v2114, %v2115
          %v2117 = vrot.slane %v2116, 2
          %v2118 = vadd.f32 %v2116, %v2117
          %v2119 = vrot.slane %v2118, 1
          %v2120 = vadd.f32 %v2118, %v2119
          %v2121 = vadd.f32 %v2047, %v2048
          %v2122 = vadd.f32 %v2121, %v2049
          %v2123 = vadd.f32 %v2122, %v2050
          %v2124 = vadd.f32 %v2123, %v2051
          %v2125 = vadd.f32 %v2124, %v2052
          %v2126 = vadd.f32 %v2125, %v2053
          %v2127 = vadd.f32 %v2126, %v2054
          %v2128 = vrot.slane %v2127, 4
          %v2129 = vadd.f32 %v2127, %v2128
          %v2130 = vrot.slane %v2129, 2
          %v2131 = vadd.f32 %v2129, %v2130
          %v2132 = vrot.slane %v2131, 1
          %v2133 = vadd.f32 %v2131, %v2132
          %v2134 = vadd.f32 %v2055, %v2056
          %v2135 = vadd.f32 %v2134, %v2057
          %v2136 = vadd.f32 %v2135, %v2058
          %v2137 = vadd.f32 %v2136, %v2059
          %v2138 = vadd.f32 %v2137, %v2060
          %v2139 = vadd.f32 %v2138, %v2061
          %v2140 = vadd.f32 %v2139, %v2062
          %v2141 = vrot.slane %v2140, 4
          %v2142 = vadd.f32 %v2140, %v2141
          %v2143 = vrot.slane %v2142, 2
          %v2144 = vadd.f32 %v2142, %v2143
          %v2145 = vrot.slane %v2144, 1
          %v2146 = vadd.f32 %v2144, %v2145
          %v2147 = vadd.f32 %v2063, %v2064
          %v2148 = vadd.f32 %v2147, %v2065
          %v2149 = vadd.f32 %v2148, %v2066
          %v2150 = vadd.f32 %v2149, %v2067
          %v2151 = vadd.f32 %v2150, %v2068
          %v2152 = vadd.f32 %v2151, %v2069
          %v2153 = vadd.f32 %v2152, %v2070
          %v2154 = vrot.slane %v2153, 4
          %v2155 = vadd.f32 %v2153, %v2154
          %v2156 = vrot.slane %v2155, 2
          %v2157 = vadd.f32 %v2155, %v2156
          %v2158 = vrot.slane %v2157, 1
          %v2159 = vadd.f32 %v2157, %v2158
          %v2160 = vadd.f32 %v2071, %v2072
          %v2161 = vadd.f32 %v2160, %v2073
          %v2162 = vadd.f32 %v2161, %v2074
          %v2163 = vadd.f32 %v2162, %v2075
          %v2164 = vadd.f32 %v2163, %v2076
          %v2165 = vadd.f32 %v2164, %v2077
          %v2166 = vadd.f32 %v2165, %v2078
          %v2167 = vrot.slane %v2166, 4
          %v2168 = vadd.f32 %v2166, %v2167
          %v2169 = vrot.slane %v2168, 2
          %v2170 = vadd.f32 %v2168, %v2169
          %v2171 = vrot.slane %v2170, 1
          %v2172 = vadd.f32 %v2170, %v2171
          %v2173 = vadd.f32 %v2079, %v2080
          %v2174 = vadd.f32 %v2173, %v2081
          %v2175 = vadd.f32 %v2174, %v2082
          %v2176 = vadd.f32 %v2175, %v2083
          %v2177 = vadd.f32 %v2176, %v2084
          %v2178 = vadd.f32 %v2177, %v2085
          %v2179 = vadd.f32 %v2178, %v2086
          %v2180 = vrot.slane %v2179, 4
          %v2181 = vadd.f32 %v2179, %v2180
          %v2182 = vrot.slane %v2181, 2
          %v2183 = vadd.f32 %v2181, %v2182
          %v2184 = vrot.slane %v2183, 1
          %v2185 = vadd.f32 %v2183, %v2184
          %v2186 = vadd.f32 %v2087, %v2088
          %v2187 = vadd.f32 %v2186, %v2089
          %v2188 = vadd.f32 %v2187, %v2090
          %v2189 = vadd.f32 %v2188, %v2091
          %v2190 = vadd.f32 %v2189, %v2092
          %v2191 = vadd.f32 %v2190, %v2093
          %v2192 = vadd.f32 %v2191, %v2094
          %v2193 = vrot.slane %v2192, 4
          %v2194 = vadd.f32 %v2192, %v2193
          %v2195 = vrot.slane %v2194, 2
          %v2196 = vadd.f32 %v2194, %v2195
          %v2197 = vrot.slane %v2196, 1
          %v2198 = vadd.f32 %v2196, %v2197
          %v2199 = vadd.f32 %v2107, %v805
          %v2200 = vadd.f32 %v2120, %v805
          %v2201 = vadd.f32 %v2133, %v805
          %v2202 = vadd.f32 %v2146, %v805
          %v2203 = vadd.f32 %v2159, %v805
          %v2204 = vadd.f32 %v2172, %v805
          %v2205 = vadd.f32 %v2185, %v805
          %v2206 = vadd.f32 %v2198, %v805
          %v2215 = vsel %vm822, %v2200, %v2199
          %v2216 = vsel %vm824, %v2201, %v2215
          %v2217 = vsel %vm826, %v2202, %v2216
          %v2218 = vsel %vm828, %v2203, %v2217
          %v2219 = vsel %vm830, %v2204, %v2218
          %v2220 = vsel %vm832, %v2205, %v2219
          %v2221 = vsel %vm834, %v2206, %v2220
          %v2223 = vmul.f32 %v1814, %v2221
          %2224 = vadd.xlane.f32.xlu0 %v2223
          %v2225 = vpop.xlane.xlu0 %2224
          %v2227 = vrot.slane %v2225, 1
          %v2228 = vrot.slane %v2225, 2
          %v2229 = vrot.slane %v2225, 3
          %v2230 = vrot.slane %v2225, 4
          %v2231 = vrot.slane %v2225, 5
          %v2232 = vrot.slane %v2225, 6
          %v2233 = vrot.slane %v2225, 7
          %v2242 = vsub.f32 %v2199, %v2225
          %v2243 = vsub.f32 %v2200, %v2227
          %v2244 = vsub.f32 %v2201, %v2228
          %v2245 = vsub.f32 %v2202, %v2229
          %v2246 = vsub.f32 %v2203, %v2230
          %v2247 = vsub.f32 %v2204, %v2231
          %v2248 = vsub.f32 %v2205, %v2232
          %v2249 = vsub.f32 %v2206, %v2233
          %v2258 = vrot.slane %v2243, 7
          %v2259 = vsel %vm822, %v2258, %v2242
          %v2260 = vrot.slane %v2244, 6
          %v2261 = vsel %vm824, %v2260, %v2259
          %v2262 = vrot.slane %v2245, 5
          %v2263 = vsel %vm826, %v2262, %v2261
          %v2264 = vrot.slane %v2246, 4
          %v2265 = vsel %vm828, %v2264, %v2263
          %v2266 = vrot.slane %v2247, 3
          %v2267 = vsel %vm830, %v2266, %v2265
          %v2268 = vrot.slane %v2248, 2
          %v2269 = vsel %vm832, %v2268, %v2267
          %v2270 = vrot.slane %v2249, 1
          %v2271 = vsel %vm834, %v2270, %v2269
          %v2273 = vmul.f32 %v1814, %v2271
          %v2274 = vrcp.pop 6.0
          %v2275 = vmul.f32 6.0, %v2274
          %v2276 = vsub.f32 1.0, %v2275
          %v2277 = vmul.f32 %v2274, %v2276
          %v2278 = vadd.f32 %v2274, %v2277
          %vm2279 = vweird.f32 %v2274
          %v2280 = vsel %vm2279, %v2274, %v2278
          %s2281 = vtos %v2280
          %s2282 = smul.f32 %s258, %s2281
          %v2283 = vadd.f32 %v1350, %v1811
          %v2284 = vmul.f32 %v2283, 2.0
          %v2285 = vadd.f32 %v887, %v2284
          %v2286 = vadd.f32 %v2285, %v2273
          %v2287 = vstv %s2282
          %v2288 = vmul.f32 %v2287, %v2286
          %v2289 = vadd.f32 %v260, %v2288
          %2290 = vst [vmem:[#allocation2] sm:$0xff] %v2289
        $region56: #{replicator_forward.1} parent=43 // pred_fallthru
          _
        %s2291 = sand.u32 %s156, 1
        %s2292 = scalar_lea.sflag [#allocation5], %s2291
        %s2293 = sand.u32 %s156, 1
        %s2294 = smul.addr %s2293, 8
        %s2295 = scalar_lea.vmem [#allocation7], %s2294
        // Predicated region
        $region57: #{replicator_forward.1} parent=43 // pred_check
          %p2296 = pneg %p166
        $region58: #{replicator_forward.1} parent=43 // pred_check_branch
          %2298 = sbr.rel (%p2296) target = $region60
        $region59: #{replicator_forward.1} parent=43 // pred_region
          %2300 = vsyncadd %s2292, 0
          %s2301 = smul.addr %s22, 8
          %s2302 = scalar_lea.hbm %s6, %s2301
          %s2304 = sshll.u32 %s2295, 4
          %s2305 = int_to_ptr.vmem [resolvable:$true] %s2304
          %s2306 = sshll.u32 %s2302, 4
          %s2307 = int_to_ptr.hbm [resolvable:$true] %s2306
          %2309 = dma.vmem_to_hbm [thread:$0]  %s2305, 128, %s2307, %s2292
        $region60: #{replicator_forward.1} parent=43 // pred_fallthru
          _
      $region44: #{replicator_forward.1} parent=5 // pred_fallthru
        _
      %p2310 = scmp.le.s32.totalorder 2, %s17
      // Predicated region
      $region61: #{replicator_forward.1} parent=5 // pred_check
        %p2311 = pneg %p2310
      $region62: #{replicator_forward.1} parent=5 // pred_check_branch
        %2313 = sbr.rel (%p2311) target = $region64
      $region63: #{replicator_forward.1} parent=5 // pred_region
        %s2314 = ssub.s32 %s17, 2
        // Predicated region
        $region65: #{replicator_forward.1} parent=63 // pred_check
          %p2315 = pneg %p172
        $region66: #{replicator_forward.1} parent=63 // pred_check_branch
          %2317 = sbr.rel (%p2315) target = $region68
        $region67: #{replicator_forward.1} parent=63 // pred_region
          %s2318 = sand.u32 %s157, 1
          %s2319 = scalar_lea.sflag [#allocation5], %s2318
          %s2320 = sand.u32 %s157, 1
          %s2321 = smul.addr %s2320, 8
          %s2322 = scalar_lea.vmem [#allocation7], %s2321
          %2324 = dma.done %s2319, 128
        $region68: #{replicator_forward.1} parent=63 // pred_fallthru
          _
      $region64: #{replicator_forward.1} parent=5 // pred_fallthru
        _
    $region6: #{replicator_forward.1} parent=1 // loop_footer
      %s21 = sadd.s32 1, %s17
    $region7: #{replicator_forward.1} parent=1 // loop_footer_branch
      %16 = sbr.rel target = $region3
    $region8: #{replicator_forward.1} parent=1 // loop_exit
      _
    %2325 = vsyncpa [#allocation5], 1
    %s2326 = scalar_lea.sflag [#allocation5], 1
    %2327 = vsyncpa %s2326, 1
    %2328 = vsyncpa [#allocation6], 1
    %s2329 = scalar_lea.sflag [#allocation6], 1
    %2330 = vsyncpa %s2329, 1

</llo_original>
